<compile_context>
chip_gen: v7x
topology: tpu7x:2x2x1
jax: 0.10.0
libtpu: 0.0.40
codegen_flags: <defaults>
</compile_context>

<pallas_src>
import functools

import jax
import jax.numpy as jnp
from jax.experimental import pallas as pl
from jax.experimental.pallas import tpu as pltpu

_LANES = 128


def _dwconv_bn_relu6_kernel(x_ref, w_ref, shift_ref, o_ref, pad_ref, *,
                            stride, padding, row_strip):
    """Fused depthwise conv + folded BN + ReLU6 for one (channel-tile, batch-block).

    x_ref:     (NB, H, W, CT)          unpadded NHWC channel tile (VMEM)
    w_ref:     (KH, KW, CT)            BN-folded depthwise weights (w * scale)
    shift_ref: (1, CT)                 BN-folded shift (beta - mean * scale)
    o_ref:     (NB, H_out, W_out, CT)  output tile
    pad_ref:   (H_pad, W_pad, CT)      VMEM scratch (input dtype), reused per image
    """
    nb, h_in, w_in, ct = x_ref.shape
    kh_size, kw_size, _ = w_ref.shape
    _, h_out, w_out, _ = o_ref.shape
    h_pad, w_pad, _ = pad_ref.shape
    pdt = pad_ref.dtype

    # Halo-only zeroing, once per grid step: the interior is overwritten by the
    # per-image copy below and the halos are never dirtied, so they stay valid
    # across the NB images of this step. Unconditional per step -> safe under
    # megacore sharding (each core zeroes its own scratch).
    if padding > 0:
        zrow = jnp.zeros((padding, w_pad, ct), pdt)
        pad_ref[0:padding, :, :] = zrow
        pad_ref[h_pad - padding:h_pad, :, :] = zrow
        zcol = jnp.zeros((h_in, padding, ct), pdt)
        pad_ref[padding:padding + h_in, 0:padding, :] = zcol
        pad_ref[padding:padding + h_in, w_pad - padding:w_pad, :] = zcol

    w = w_ref[...].astype(jnp.float32)          # (KH, KW, CT), BN-folded
    shift = shift_ref[...].astype(jnp.float32)  # (1, CT), BN-folded
    cols_span = stride * (w_out - 1) + 1
    # Hoisted accumulator init (broadcast_in_dim is not CSE'd by JAX).
    shift_full = jnp.broadcast_to(shift, (row_strip, w_out, ct))

    for b in range(nb):
        # In-kernel zero padding: interior copy kept in the input dtype; the
        # cast to f32 happens on the load side of each tap.
        pad_ref[padding:padding + h_in, padding:padding + w_in, :] = x_ref[b]

        # Strip-tiled accumulation: each strip's f32 accumulator stays
        # register-resident across all KH*KW taps and is stored exactly once.
        for r0 in range(0, h_out, row_strip):
            rs = min(row_strip, h_out - r0)
            rows_span = stride * (rs - 1) + 1 + (kh_size - 1)
            r_lo = r0 * stride
            # Leading-axis (non-layout) slice of the padded image.
            xrows = pad_ref[r_lo:r_lo + rows_span, :, :]
            acc = (shift_full if rs == row_strip
                   else jnp.broadcast_to(shift, (rs, w_out, ct)))
            for kw in range(kw_size):
                # The kw shift lands on the sublane axis and is unaligned for
                # kw>0, so it is hoisted out of the kh loop: one shifted view
                # per (strip, kw) instead of per (kh, kw).
                xs = jax.lax.slice(
                    xrows, (0, kw, 0),
                    (rows_span, kw + cols_span, ct),
                    (1, stride, 1))                   # (rows_span, w_out, ct)
                for kh in range(kh_size):
                    # kh shift rides the leading (non-layout) axis: layout-free.
                    win = jax.lax.slice(
                        xs, (kh, 0, 0),
                        (kh + stride * (rs - 1) + 1, w_out, ct),
                        (stride, 1, 1))               # (rs, w_out, ct)
                    acc = acc + win.astype(jnp.float32) * w[kh, kw]
            # BN already folded into weights / acc init; only ReLU6 remains.
            o_ref[b, r0:r0 + rs, :, :] = jnp.clip(acc, 0.0, 6.0).astype(o_ref.dtype)


def _vmem_capacity_bytes():
    try:
        return int(pltpu.get_tpu_info().vmem_capacity_bytes)
    except Exception:
        return 64 * 1024 * 1024   # conservative (v7x per-TensorCore capacity)


def _divisors_desc(n):
    return [d for d in range(n, 0, -1) if n % d == 0]


def depthwise_convolution_block(x_nchw, conv_weight, gamma, beta,
                                running_mean, running_var,
                                *, stride=1, padding=1, eps=1e-5):
    """Forward of DepthwiseConvolutionBlock (PyTorch NCHW convention, eval-mode BN).

    x_nchw:      (N, C, H, W)
    conv_weight: (C, 1, KH, KW)   depthwise conv weight (PyTorch layout)
    gamma/beta/running_mean/running_var: (C,) BatchNorm2d parameters.
    """
    N, C, H, W = x_nchw.shape
    Cw, one, KH, KW = conv_weight.shape
    assert Cw == C and one == 1

    H_out = (H + 2 * padding - KH) // stride + 1
    W_out = (W + 2 * padding - KW) // stride + 1
    H_pad = H + 2 * padding
    W_pad = W + 2 * padding

    # --- Small-C lane packing: fold nb images into the lane axis when C << 128.
    nb = 1 if C >= _LANES else max(1, min(N, _LANES // C))
    while N % nb != 0:
        nb -= 1
    Nf = N // nb          # folded batch
    Cf = nb * C           # folded channels

    # Lane-dense channels: pad the folded channel axis up to a multiple of 128.
    CT = _LANES
    Cp = ((Cf + CT - 1) // CT) * CT
    num_c_tiles = Cp // CT

    x_dtype = x_nchw.dtype
    x_item = jnp.dtype(x_dtype).itemsize

    # --- Per-chip VMEM budget and batch blocking (NB folded images per step).
    cap = max(min(int(0.75 * _vmem_capacity_bytes()), 100 * 1024 * 1024),
              16 * 1024 * 1024)
    w_bytes = KH * KW * CT * 4 + CT * 4
    scratch_bytes = H_pad * W_pad * CT * x_item

    def step_need(nb_img):
        in_blk = nb_img * H * W * CT * x_item
        out_blk = nb_img * H_out * W_out * CT * x_item
        return 2 * (in_blk + out_blk) + 2 * w_bytes + scratch_bytes

    NB = 1
    for d in _divisors_desc(Nf):
        if step_need(d) <= cap:
            NB = d
            break
    # Keep at least 2 grid steps along the parallel axes when possible so both
    # v7x TensorCores get work.
    if num_c_tiles == 1 and Nf >= 2 and Nf // NB < 2:
        for d in _divisors_desc(Nf):
            if d <= Nf // 2:
                NB = d
                break
    n_steps = Nf // NB

    vmem_limit = int(min(max(step_need(NB) + (4 << 20), 16 << 20), cap))

    # Strip size: keep each strip's f32 accumulator around ~16 vregs.
    row_strip = max(1, min(H_out, (16 * 1024) // (W_out * CT)))

    # --- Wrapper layout glue: NCHW -> (Nf, H, W, nb*C) with batch folded into
    # lanes (a plain NCHW->NHWC transpose when nb == 1), plus channel pad to Cp.
    x = x_nchw.reshape(Nf, nb, C, H, W)
    x = jnp.transpose(x, (0, 3, 4, 1, 2)).reshape(Nf, H, W, Cf)
    if Cp != Cf:
        x = jnp.pad(x, ((0, 0), (0, 0), (0, 0), (0, Cp - Cf)))

    # --- Fold BN (eval-mode running stats) into the conv weights and a shift.
    scale = (gamma / jnp.sqrt(running_var + eps)).astype(jnp.float32)
    shift = (beta - running_mean * scale).astype(jnp.float32)
    w_hwc = jnp.transpose(conv_weight[:, 0, :, :], (1, 2, 0)).astype(jnp.float32)
    w_folded = jnp.tile(w_hwc * scale[None, None, :], (1, 1, nb))   # (KH, KW, Cf)
    shift_f = jnp.tile(shift, nb)                                   # (Cf,)
    if Cp != Cf:
        # Padded lanes get zero weight AND zero shift -> ReLU6(0)=0, sliced off.
        w_folded = jnp.pad(w_folded, ((0, 0), (0, 0), (0, Cp - Cf)))
        shift_f = jnp.pad(shift_f, (0, Cp - Cf))
    shift_f = shift_f.reshape(1, Cp)

    kernel = functools.partial(_dwconv_bn_relu6_kernel,
                               stride=stride, padding=padding,
                               row_strip=row_strip)

    out_nhwc = pl.pallas_call(
        kernel,
        out_shape=jax.ShapeDtypeStruct((Nf, H_out, W_out, Cp), x_dtype),
        grid=(num_c_tiles, n_steps),
        in_specs=[
            pl.BlockSpec((NB, H, W, CT), lambda ct, n: (n, 0, 0, ct)),
            # Constant along the inner batch axis -> stays resident in VMEM.
            pl.BlockSpec((KH, KW, CT), lambda ct, n: (0, 0, ct)),
            pl.BlockSpec((1, CT), lambda ct, n: (0, ct)),
        ],
        out_specs=pl.BlockSpec((NB, H_out, W_out, CT),
                               lambda ct, n: (n, 0, 0, ct)),
        scratch_shapes=[pltpu.VMEM((H_pad, W_pad, CT), x_dtype)],
        compiler_params=pltpu.CompilerParams(
            dimension_semantics=("parallel", "parallel"),
            vmem_limit_bytes=vmem_limit),
    )(x, w_folded, shift_f)

    # --- Undo the lane packing / channel pad and return NCHW.
    out = out_nhwc[..., :Cf].reshape(Nf, H_out, W_out, nb, C)
    out = jnp.transpose(out, (0, 3, 4, 1, 2)).reshape(N, C, H_out, W_out)
    return out


if __name__ == "__main__":
    # Small shapes consistent with the module: batch=2, channels=4, spatial=16,
    # kernel_size=3, padding=1, stride=1 (groups = channels -> depthwise).
    key = jax.random.PRNGKey(0)
    k_x, k_w, k_g, k_b, k_m, k_v = jax.random.split(key, 6)

    N, C, H, W = 2, 4, 16, 16
    KH = KW = 3

    x = jax.random.normal(k_x, (N, C, H, W), dtype=jnp.float32)
    conv_weight = jax.random.normal(k_w, (C, 1, KH, KW), dtype=jnp.float32) * 0.1
    gamma = jax.random.uniform(k_g, (C,), dtype=jnp.float32, minval=0.5, maxval=1.5)
    beta = jax.random.normal(k_b, (C,), dtype=jnp.float32) * 0.1
    running_mean = jax.random.normal(k_m, (C,), dtype=jnp.float32) * 0.1
    running_var = jax.random.uniform(k_v, (C,), dtype=jnp.float32, minval=0.5, maxval=1.5)

    out = depthwise_convolution_block(
        x, conv_weight, gamma, beta, running_mean, running_var,
        stride=1, padding=1)
    out = jax.block_until_ready(out)
    assert out.shape == (N, C, H, W), out.shape

    # Pure-JAX reference (same eval-mode BN fold + ReLU6).
    eps = 1e-5
    conv = jax.lax.conv_general_dilated(
        x, conv_weight, window_strides=(1, 1),
        padding=((1, 1), (1, 1)),
        dimension_numbers=("NCHW", "OIHW", "NCHW"),
        feature_group_count=C,
        precision=jax.lax.Precision.HIGHEST)
    scale = gamma / jnp.sqrt(running_var + eps)
    shift = beta - running_mean * scale
    ref = jnp.clip(conv * scale[None, :, None, None]
                   + shift[None, :, None, None], 0.0, 6.0)
    max_err = float(jnp.max(jnp.abs(out - ref)))
    assert jnp.allclose(out, ref, atol=1e-3, rtol=1e-3), max_err

    print("KERNEL_OK")
</pallas_src>

<mosaic_0001>
module attributes {stable_mosaic.version = 11 : i64} {
  func.func @_dwconv_bn_relu6_kernel(%arg0: i32, %arg1: i32, %arg2: memref<1x16x16x128xf32, #tpu.memory_space<vmem>>, %arg3: memref<3x3x128xf32, #tpu.memory_space<vmem>>, %arg4: memref<1x128xf32, #tpu.memory_space<vmem>>, %arg5: memref<1x16x16x128xf32, #tpu.memory_space<vmem>>, %arg6: memref<18x18x128xf32, #tpu.memory_space<vmem>>) attributes {dimension_semantics = [#tpu.dimension_semantics<parallel>, #tpu.dimension_semantics<parallel>], iteration_bounds = array<i64: 1, 1>, scalar_prefetch = 0 : i64, scratch_operands = 1 : i64, tpu.core_type = #tpu.core_type<tc>, window_params = [{transform_indices = @transform_0, window_bounds = array<i64: 1, 16, 16, 128>}, {transform_indices = @transform_1, window_bounds = array<i64: 3, 3, 128>}, {transform_indices = @transform_2, window_bounds = array<i64: 1, 128>}, {transform_indices = @transform_3, window_bounds = array<i64: 1, 16, 16, 128>}]} {
    %cst = arith.constant 0.000000e+00 : f32
    %0 = vector.broadcast %cst : f32 to vector<1x18x128xf32>
    %c0 = arith.constant 0 : index
    %c0_0 = arith.constant 0 : index
    %c0_1 = arith.constant 0 : index
    %1 = vector.load %arg6[%c0, %c0_0, %c0_1] : memref<18x18x128xf32, #tpu.memory_space<vmem>>, vector<1x18x128xf32>
    tpu.vector_store %arg6[%c0, %c0_0, %c0_1], %0 {strides = array<i32>} : memref<18x18x128xf32, #tpu.memory_space<vmem>>, vector<1x18x128xf32>,
    %c17 = arith.constant 17 : index
    %c0_2 = arith.constant 0 : index
    %c0_3 = arith.constant 0 : index
    %2 = vector.load %arg6[%c17, %c0_2, %c0_3] : memref<18x18x128xf32, #tpu.memory_space<vmem>>, vector<1x18x128xf32>
    tpu.vector_store %arg6[%c17, %c0_2, %c0_3], %0 {strides = array<i32>} : memref<18x18x128xf32, #tpu.memory_space<vmem>>, vector<1x18x128xf32>,
    %cst_4 = arith.constant 0.000000e+00 : f32
    %3 = vector.broadcast %cst_4 : f32 to vector<16x1x128xf32>
    %c1 = arith.constant 1 : index
    %c0_5 = arith.constant 0 : index
    %c0_6 = arith.constant 0 : index
    %4 = vector.load %arg6[%c1, %c0_5, %c0_6] : memref<18x18x128xf32, #tpu.memory_space<vmem>>, vector<16x1x128xf32>
    tpu.vector_store %arg6[%c1, %c0_5, %c0_6], %3 {strides = array<i32>} : memref<18x18x128xf32, #tpu.memory_space<vmem>>, vector<16x1x128xf32>,
    %c1_7 = arith.constant 1 : index
    %c17_8 = arith.constant 17 : index
    %c0_9 = arith.constant 0 : index
    %5 = vector.load %arg6[%c1_7, %c17_8, %c0_9] : memref<18x18x128xf32, #tpu.memory_space<vmem>>, vector<16x1x128xf32>
    tpu.vector_store %arg6[%c1_7, %c17_8, %c0_9], %3 {strides = array<i32>} : memref<18x18x128xf32, #tpu.memory_space<vmem>>, vector<16x1x128xf32>,
    %c0_10 = arith.constant 0 : index
    %c0_11 = arith.constant 0 : index
    %c0_12 = arith.constant 0 : index
    %6 = vector.load %arg3[%c0_10, %c0_11, %c0_12] : memref<3x3x128xf32, #tpu.memory_space<vmem>>, vector<3x3x128xf32>
    %c0_13 = arith.constant 0 : index
    %c0_14 = arith.constant 0 : index
    %7 = vector.load %arg4[%c0_13, %c0_14] : memref<1x128xf32, #tpu.memory_space<vmem>>, vector<1x128xf32>
    %8 = vector.shape_cast %7 : vector<1x128xf32> to vector<1x1x128xf32>
    %9 = vector.broadcast %8 : vector<1x1x128xf32> to vector<8x16x128xf32>
    %c0_15 = arith.constant 0 : index
    %c0_16 = arith.constant 0 : index
    %c0_17 = arith.constant 0 : index
    %c0_18 = arith.constant 0 : index
    %10 = vector.load %arg2[%c0_15, %c0_16, %c0_17, %c0_18] : memref<1x16x16x128xf32, #tpu.memory_space<vmem>>, vector<1x16x16x128xf32>
    %11 = vector.shape_cast %10 : vector<1x16x16x128xf32> to vector<16x16x128xf32>
    %c1_19 = arith.constant 1 : index
    %c1_20 = arith.constant 1 : index
    %c0_21 = arith.constant 0 : index
    %12 = vector.load %arg6[%c1_19, %c1_20, %c0_21] : memref<18x18x128xf32, #tpu.memory_space<vmem>>, vector<16x16x128xf32>
    tpu.vector_store %arg6[%c1_19, %c1_20, %c0_21], %11 {strides = array<i32>} : memref<18x18x128xf32, #tpu.memory_space<vmem>>, vector<16x16x128xf32>,
    %c0_22 = arith.constant 0 : index
    %c0_23 = arith.constant 0 : index
    %c0_24 = arith.constant 0 : index
    %13 = vector.load %arg6[%c0_22, %c0_23, %c0_24] : memref<18x18x128xf32, #tpu.memory_space<vmem>>, vector<10x18x128xf32>
    %14 = vector.extract_strided_slice %13 {offsets = [0, 0, 0], sizes = [10, 16, 128], strides = [1, 1, 1]} : vector<10x18x128xf32> to vector<10x16x128xf32>
    %15 = vector.extract_strided_slice %14 {offsets = [0, 0, 0], sizes = [8, 16, 128], strides = [1, 1, 1]} : vector<10x16x128xf32> to vector<8x16x128xf32>
    %16 = vector.extract_strided_slice %6 {offsets = [0, 0, 0], sizes = [1, 1, 128], strides = [1, 1, 1]} : vector<3x3x128xf32> to vector<1x1x128xf32>
    %17 = vector.shape_cast %16 : vector<1x1x128xf32> to vector<128xf32>
    %18 = vector.shape_cast %17 : vector<128xf32> to vector<1x1x128xf32>
    %19 = vector.broadcast %18 : vector<1x1x128xf32> to vector<8x16x128xf32>
    %20 = arith.mulf %15, %19 : vector<8x16x128xf32>
    %21 = arith.addf %9, %20 : vector<8x16x128xf32>
    %22 = vector.extract_strided_slice %14 {offsets = [1, 0, 0], sizes = [8, 16, 128], strides = [1, 1, 1]} : vector<10x16x128xf32> to vector<8x16x128xf32>
    %23 = vector.extract_strided_slice %6 {offsets = [1, 0, 0], sizes = [1, 1, 128], strides = [1, 1, 1]} : vector<3x3x128xf32> to vector<1x1x128xf32>
    %24 = vector.shape_cast %23 : vector<1x1x128xf32> to vector<128xf32>
    %25 = vector.shape_cast %24 : vector<128xf32> to vector<1x1x128xf32>
    %26 = vector.broadcast %25 : vector<1x1x128xf32> to vector<8x16x128xf32>
    %27 = arith.mulf %22, %26 : vector<8x16x128xf32>
    %28 = arith.addf %21, %27 : vector<8x16x128xf32>
    %29 = vector.extract_strided_slice %14 {offsets = [2, 0, 0], sizes = [8, 16, 128], strides = [1, 1, 1]} : vector<10x16x128xf32> to vector<8x16x128xf32>
    %30 = vector.extract_strided_slice %6 {offsets = [2, 0, 0], sizes = [1, 1, 128], strides = [1, 1, 1]} : vector<3x3x128xf32> to vector<1x1x128xf32>
    %31 = vector.shape_cast %30 : vector<1x1x128xf32> to vector<128xf32>
    %32 = vector.shape_cast %31 : vector<128xf32> to vector<1x1x128xf32>
    %33 = vector.broadcast %32 : vector<1x1x128xf32> to vector<8x16x128xf32>
    %34 = arith.mulf %29, %33 : vector<8x16x128xf32>
    %35 = arith.addf %28, %34 : vector<8x16x128xf32>
    %36 = vector.extract_strided_slice %13 {offsets = [0, 1, 0], sizes = [10, 16, 128], strides = [1, 1, 1]} : vector<10x18x128xf32> to vector<10x16x128xf32>
    %37 = vector.extract_strided_slice %36 {offsets = [0, 0, 0], sizes = [8, 16, 128], strides = [1, 1, 1]} : vector<10x16x128xf32> to vector<8x16x128xf32>
    %38 = vector.extract_strided_slice %6 {offsets = [0, 1, 0], sizes = [1, 1, 128], strides = [1, 1, 1]} : vector<3x3x128xf32> to vector<1x1x128xf32>
    %39 = vector.shape_cast %38 : vector<1x1x128xf32> to vector<128xf32>
    %40 = vector.shape_cast %39 : vector<128xf32> to vector<1x1x128xf32>
    %41 = vector.broadcast %40 : vector<1x1x128xf32> to vector<8x16x128xf32>
    %42 = arith.mulf %37, %41 : vector<8x16x128xf32>
    %43 = arith.addf %35, %42 : vector<8x16x128xf32>
    %44 = vector.extract_strided_slice %36 {offsets = [1, 0, 0], sizes = [8, 16, 128], strides = [1, 1, 1]} : vector<10x16x128xf32> to vector<8x16x128xf32>
    %45 = vector.extract_strided_slice %6 {offsets = [1, 1, 0], sizes = [1, 1, 128], strides = [1, 1, 1]} : vector<3x3x128xf32> to vector<1x1x128xf32>
    %46 = vector.shape_cast %45 : vector<1x1x128xf32> to vector<128xf32>
    %47 = vector.shape_cast %46 : vector<128xf32> to vector<1x1x128xf32>
    %48 = vector.broadcast %47 : vector<1x1x128xf32> to vector<8x16x128xf32>
    %49 = arith.mulf %44, %48 : vector<8x16x128xf32>
    %50 = arith.addf %43, %49 : vector<8x16x128xf32>
    %51 = vector.extract_strided_slice %36 {offsets = [2, 0, 0], sizes = [8, 16, 128], strides = [1, 1, 1]} : vector<10x16x128xf32> to vector<8x16x128xf32>
    %52 = vector.extract_strided_slice %6 {offsets = [2, 1, 0], sizes = [1, 1, 128], strides = [1, 1, 1]} : vector<3x3x128xf32> to vector<1x1x128xf32>
    %53 = vector.shape_cast %52 : vector<1x1x128xf32> to vector<128xf32>
    %54 = vector.shape_cast %53 : vector<128xf32> to vector<1x1x128xf32>
    %55 = vector.broadcast %54 : vector<1x1x128xf32> to vector<8x16x128xf32>
    %56 = arith.mulf %51, %55 : vector<8x16x128xf32>
    %57 = arith.addf %50, %56 : vector<8x16x128xf32>
    %58 = vector.extract_strided_slice %13 {offsets = [0, 2, 0], sizes = [10, 16, 128], strides = [1, 1, 1]} : vector<10x18x128xf32> to vector<10x16x128xf32>
    %59 = vector.extract_strided_slice %58 {offsets = [0, 0, 0], sizes = [8, 16, 128], strides = [1, 1, 1]} : vector<10x16x128xf32> to vector<8x16x128xf32>
    %60 = vector.extract_strided_slice %6 {offsets = [0, 2, 0], sizes = [1, 1, 128], strides = [1, 1, 1]} : vector<3x3x128xf32> to vector<1x1x128xf32>
    %61 = vector.shape_cast %60 : vector<1x1x128xf32> to vector<128xf32>
    %62 = vector.shape_cast %61 : vector<128xf32> to vector<1x1x128xf32>
    %63 = vector.broadcast %62 : vector<1x1x128xf32> to vector<8x16x128xf32>
    %64 = arith.mulf %59, %63 : vector<8x16x128xf32>
    %65 = arith.addf %57, %64 : vector<8x16x128xf32>
    %66 = vector.extract_strided_slice %58 {offsets = [1, 0, 0], sizes = [8, 16, 128], strides = [1, 1, 1]} : vector<10x16x128xf32> to vector<8x16x128xf32>
    %67 = vector.extract_strided_slice %6 {offsets = [1, 2, 0], sizes = [1, 1, 128], strides = [1, 1, 1]} : vector<3x3x128xf32> to vector<1x1x128xf32>
    %68 = vector.shape_cast %67 : vector<1x1x128xf32> to vector<128xf32>
    %69 = vector.shape_cast %68 : vector<128xf32> to vector<1x1x128xf32>
    %70 = vector.broadcast %69 : vector<1x1x128xf32> to vector<8x16x128xf32>
    %71 = arith.mulf %66, %70 : vector<8x16x128xf32>
    %72 = arith.addf %65, %71 : vector<8x16x128xf32>
    %73 = vector.extract_strided_slice %58 {offsets = [2, 0, 0], sizes = [8, 16, 128], strides = [1, 1, 1]} : vector<10x16x128xf32> to vector<8x16x128xf32>
    %74 = vector.extract_strided_slice %6 {offsets = [2, 2, 0], sizes = [1, 1, 128], strides = [1, 1, 1]} : vector<3x3x128xf32> to vector<1x1x128xf32>
    %75 = vector.shape_cast %74 : vector<1x1x128xf32> to vector<128xf32>
    %76 = vector.shape_cast %75 : vector<128xf32> to vector<1x1x128xf32>
    %77 = vector.broadcast %76 : vector<1x1x128xf32> to vector<8x16x128xf32>
    %78 = arith.mulf %73, %77 : vector<8x16x128xf32>
    %79 = arith.addf %72, %78 : vector<8x16x128xf32>
    %cst_25 = arith.constant 0.000000e+00 : f32
    %cst_26 = arith.constant 6.000000e+00 : f32
    %80 = vector.broadcast %cst_25 : f32 to vector<8x16x128xf32>
    %81 = arith.maximumf %80, %79 : vector<8x16x128xf32>
    %82 = vector.broadcast %cst_26 : f32 to vector<8x16x128xf32>
    %83 = arith.minimumf %82, %81 : vector<8x16x128xf32>
    %c0_27 = arith.constant 0 : index
    %c0_28 = arith.constant 0 : index
    %c0_29 = arith.constant 0 : index
    %c0_30 = arith.constant 0 : index
    %84 = vector.load %arg5[%c0_27, %c0_28, %c0_29, %c0_30] : memref<1x16x16x128xf32, #tpu.memory_space<vmem>>, vector<1x8x16x128xf32>
    %85 = vector.shape_cast %84 : vector<1x8x16x128xf32> to vector<8x16x128xf32>
    %86 = vector.shape_cast %83 : vector<8x16x128xf32> to vector<1x8x16x128xf32>
    tpu.vector_store %arg5[%c0_27, %c0_28, %c0_29, %c0_30], %86 {strides = array<i32>} : memref<1x16x16x128xf32, #tpu.memory_space<vmem>>, vector<1x8x16x128xf32>,
    %c8 = arith.constant 8 : index
    %c0_31 = arith.constant 0 : index
    %c0_32 = arith.constant 0 : index
    %87 = vector.load %arg6[%c8, %c0_31, %c0_32] : memref<18x18x128xf32, #tpu.memory_space<vmem>>, vector<10x18x128xf32>
    %88 = vector.extract_strided_slice %87 {offsets = [0, 0, 0], sizes = [10, 16, 128], strides = [1, 1, 1]} : vector<10x18x128xf32> to vector<10x16x128xf32>
    %89 = vector.extract_strided_slice %88 {offsets = [0, 0, 0], sizes = [8, 16, 128], strides = [1, 1, 1]} : vector<10x16x128xf32> to vector<8x16x128xf32>
    %90 = vector.extract_strided_slice %6 {offsets = [0, 0, 0], sizes = [1, 1, 128], strides = [1, 1, 1]} : vector<3x3x128xf32> to vector<1x1x128xf32>
    %91 = vector.shape_cast %90 : vector<1x1x128xf32> to vector<128xf32>
    %92 = vector.shape_cast %91 : vector<128xf32> to vector<1x1x128xf32>
    %93 = vector.broadcast %92 : vector<1x1x128xf32> to vector<8x16x128xf32>
    %94 = arith.mulf %89, %93 : vector<8x16x128xf32>
    %95 = arith.addf %9, %94 : vector<8x16x128xf32>
    %96 = vector.extract_strided_slice %88 {offsets = [1, 0, 0], sizes = [8, 16, 128], strides = [1, 1, 1]} : vector<10x16x128xf32> to vector<8x16x128xf32>
    %97 = vector.extract_strided_slice %6 {offsets = [1, 0, 0], sizes = [1, 1, 128], strides = [1, 1, 1]} : vector<3x3x128xf32> to vector<1x1x128xf32>
    %98 = vector.shape_cast %97 : vector<1x1x128xf32> to vector<128xf32>
    %99 = vector.shape_cast %98 : vector<128xf32> to vector<1x1x128xf32>
    %100 = vector.broadcast %99 : vector<1x1x128xf32> to vector<8x16x128xf32>
    %101 = arith.mulf %96, %100 : vector<8x16x128xf32>
    %102 = arith.addf %95, %101 : vector<8x16x128xf32>
    %103 = vector.extract_strided_slice %88 {offsets = [2, 0, 0], sizes = [8, 16, 128], strides = [1, 1, 1]} : vector<10x16x128xf32> to vector<8x16x128xf32>
    %104 = vector.extract_strided_slice %6 {offsets = [2, 0, 0], sizes = [1, 1, 128], strides = [1, 1, 1]} : vector<3x3x128xf32> to vector<1x1x128xf32>
    %105 = vector.shape_cast %104 : vector<1x1x128xf32> to vector<128xf32>
    %106 = vector.shape_cast %105 : vector<128xf32> to vector<1x1x128xf32>
    %107 = vector.broadcast %106 : vector<1x1x128xf32> to vector<8x16x128xf32>
    %108 = arith.mulf %103, %107 : vector<8x16x128xf32>
    %109 = arith.addf %102, %108 : vector<8x16x128xf32>
    %110 = vector.extract_strided_slice %87 {offsets = [0, 1, 0], sizes = [10, 16, 128], strides = [1, 1, 1]} : vector<10x18x128xf32> to vector<10x16x128xf32>
    %111 = vector.extract_strided_slice %110 {offsets = [0, 0, 0], sizes = [8, 16, 128], strides = [1, 1, 1]} : vector<10x16x128xf32> to vector<8x16x128xf32>
    %112 = vector.extract_strided_slice %6 {offsets = [0, 1, 0], sizes = [1, 1, 128], strides = [1, 1, 1]} : vector<3x3x128xf32> to vector<1x1x128xf32>
    %113 = vector.shape_cast %112 : vector<1x1x128xf32> to vector<128xf32>
    %114 = vector.shape_cast %113 : vector<128xf32> to vector<1x1x128xf32>
    %115 = vector.broadcast %114 : vector<1x1x128xf32> to vector<8x16x128xf32>
    %116 = arith.mulf %111, %115 : vector<8x16x128xf32>
    %117 = arith.addf %109, %116 : vector<8x16x128xf32>
    %118 = vector.extract_strided_slice %110 {offsets = [1, 0, 0], sizes = [8, 16, 128], strides = [1, 1, 1]} : vector<10x16x128xf32> to vector<8x16x128xf32>
    %119 = vector.extract_strided_slice %6 {offsets = [1, 1, 0], sizes = [1, 1, 128], strides = [1, 1, 1]} : vector<3x3x128xf32> to vector<1x1x128xf32>
    %120 = vector.shape_cast %119 : vector<1x1x128xf32> to vector<128xf32>
    %121 = vector.shape_cast %120 : vector<128xf32> to vector<1x1x128xf32>
    %122 = vector.broadcast %121 : vector<1x1x128xf32> to vector<8x16x128xf32>
    %123 = arith.mulf %118, %122 : vector<8x16x128xf32>
    %124 = arith.addf %117, %123 : vector<8x16x128xf32>
    %125 = vector.extract_strided_slice %110 {offsets = [2, 0, 0], sizes = [8, 16, 128], strides = [1, 1, 1]} : vector<10x16x128xf32> to vector<8x16x128xf32>
    %126 = vector.extract_strided_slice %6 {offsets = [2, 1, 0], sizes = [1, 1, 128], strides = [1, 1, 1]} : vector<3x3x128xf32> to vector<1x1x128xf32>
    %127 = vector.shape_cast %126 : vector<1x1x128xf32> to vector<128xf32>
    %128 = vector.shape_cast %127 : vector<128xf32> to vector<1x1x128xf32>
    %129 = vector.broadcast %128 : vector<1x1x128xf32> to vector<8x16x128xf32>
    %130 = arith.mulf %125, %129 : vector<8x16x128xf32>
    %131 = arith.addf %124, %130 : vector<8x16x128xf32>
    %132 = vector.extract_strided_slice %87 {offsets = [0, 2, 0], sizes = [10, 16, 128], strides = [1, 1, 1]} : vector<10x18x128xf32> to vector<10x16x128xf32>
    %133 = vector.extract_strided_slice %132 {offsets = [0, 0, 0], sizes = [8, 16, 128], strides = [1, 1, 1]} : vector<10x16x128xf32> to vector<8x16x128xf32>
    %134 = vector.extract_strided_slice %6 {offsets = [0, 2, 0], sizes = [1, 1, 128], strides = [1, 1, 1]} : vector<3x3x128xf32> to vector<1x1x128xf32>
    %135 = vector.shape_cast %134 : vector<1x1x128xf32> to vector<128xf32>
    %136 = vector.shape_cast %135 : vector<128xf32> to vector<1x1x128xf32>
    %137 = vector.broadcast %136 : vector<1x1x128xf32> to vector<8x16x128xf32>
    %138 = arith.mulf %133, %137 : vector<8x16x128xf32>
    %139 = arith.addf %131, %138 : vector<8x16x128xf32>
    %140 = vector.extract_strided_slice %132 {offsets = [1, 0, 0], sizes = [8, 16, 128], strides = [1, 1, 1]} : vector<10x16x128xf32> to vector<8x16x128xf32>
    %141 = vector.extract_strided_slice %6 {offsets = [1, 2, 0], sizes = [1, 1, 128], strides = [1, 1, 1]} : vector<3x3x128xf32> to vector<1x1x128xf32>
    %142 = vector.shape_cast %141 : vector<1x1x128xf32> to vector<128xf32>
    %143 = vector.shape_cast %142 : vector<128xf32> to vector<1x1x128xf32>
    %144 = vector.broadcast %143 : vector<1x1x128xf32> to vector<8x16x128xf32>
    %145 = arith.mulf %140, %144 : vector<8x16x128xf32>
    %146 = arith.addf %139, %145 : vector<8x16x128xf32>
    %147 = vector.extract_strided_slice %132 {offsets = [2, 0, 0], sizes = [8, 16, 128], strides = [1, 1, 1]} : vector<10x16x128xf32> to vector<8x16x128xf32>
    %148 = vector.extract_strided_slice %6 {offsets = [2, 2, 0], sizes = [1, 1, 128], strides = [1, 1, 1]} : vector<3x3x128xf32> to vector<1x1x128xf32>
    %149 = vector.shape_cast %148 : vector<1x1x128xf32> to vector<128xf32>
    %150 = vector.shape_cast %149 : vector<128xf32> to vector<1x1x128xf32>
    %151 = vector.broadcast %150 : vector<1x1x128xf32> to vector<8x16x128xf32>
    %152 = arith.mulf %147, %151 : vector<8x16x128xf32>
    %153 = arith.addf %146, %152 : vector<8x16x128xf32>
    %cst_33 = arith.constant 0.000000e+00 : f32
    %cst_34 = arith.constant 6.000000e+00 : f32
    %154 = vector.broadcast %cst_33 : f32 to vector<8x16x128xf32>
    %155 = arith.maximumf %154, %153 : vector<8x16x128xf32>
    %156 = vector.broadcast %cst_34 : f32 to vector<8x16x128xf32>
    %157 = arith.minimumf %156, %155 : vector<8x16x128xf32>
    %c0_35 = arith.constant 0 : index
    %c8_36 = arith.constant 8 : index
    %c0_37 = arith.constant 0 : index
    %c0_38 = arith.constant 0 : index
    %158 = vector.load %arg5[%c0_35, %c8_36, %c0_37, %c0_38] : memref<1x16x16x128xf32, #tpu.memory_space<vmem>>, vector<1x8x16x128xf32>
    %159 = vector.shape_cast %158 : vector<1x8x16x128xf32> to vector<8x16x128xf32>
    %160 = vector.shape_cast %157 : vector<8x16x128xf32> to vector<1x8x16x128xf32>
    tpu.vector_store %arg5[%c0_35, %c8_36, %c0_37, %c0_38], %160 {strides = array<i32>} : memref<1x16x16x128xf32, #tpu.memory_space<vmem>>, vector<1x8x16x128xf32>,
    return
  }
  func.func @transform_0(%arg0: i32, %arg1: i32) -> (i32, i32, i32, i32) {
    %c0_i32 = arith.constant 0 : i32
    %c0_i32_0 = arith.constant 0 : i32
    %c0_i32_1 = arith.constant 0 : i32
    return %arg1, %c0_i32, %c0_i32_0, %arg0 : i32, i32, i32, i32
  }
  func.func @transform_1(%arg0: i32, %arg1: i32) -> (i32, i32, i32) {
    %c0_i32 = arith.constant 0 : i32
    %c0_i32_0 = arith.constant 0 : i32
    %c0_i32_1 = arith.constant 0 : i32
    return %c0_i32, %c0_i32_0, %arg0 : i32, i32, i32
  }
  func.func @transform_2(%arg0: i32, %arg1: i32) -> (i32, i32) {
    %c0_i32 = arith.constant 0 : i32
    %c0_i32_0 = arith.constant 0 : i32
    return %c0_i32, %arg0 : i32, i32
  }
  func.func @transform_3(%arg0: i32, %arg1: i32) -> (i32, i32, i32, i32) {
    %c0_i32 = arith.constant 0 : i32
    %c0_i32_0 = arith.constant 0 : i32
    %c0_i32_1 = arith.constant 0 : i32
    return %arg1, %c0_i32, %c0_i32_0, %arg0 : i32, i32, i32, i32
  }
}

</mosaic_0001>

<llo_original>
// kernel: tpu_custom_call.1
$region0: #{tpu_custom_call.1}
  #allocation0 [shape = 'u32[]', space=smem, size = 0x4, offset = 0x4, fixed_abs, tag = 'smem constant byte address 0x4 - core index']
  #allocation1 [shape = 'u32[144,128]{1,0:T(1,128)}', space=vmem, size = 0x12000, scoped, tag = 'internal scratch']
  #allocation2 [shape = 'f32[18,18,128]{2,1,0:T(8,128)}', space=vmem, size = 0x36000, scoped, tag = 'scratch operand']
  %s0 = inlined_call_operand.hbm [shape: f32[1,16,16,128], index: 0, kind: input, shape index: {}]
  %s1 = inlined_call_operand.hbm [shape: f32[3,3,128], index: 1, kind: input, shape index: {}]
  %s2 = inlined_call_operand.vmem [shape: f32[1,128], index: 2, kind: input, shape index: {}]
  %s3 = inlined_call_operand.hbm [shape: f32[1,16,16,128], index: 3, kind: output, shape index: {}]
  %s4 = sld [smem:[#allocation0]]
  $region30: #{tpu_custom_call.1} parent=0
    _
  %s6 = ssub.s32 1, %s4
  %s7 = scalar_select 0, %s6, %s4
  $region1: #{tpu_custom_call.1} parent=0
    #allocation3 [shape = 'u8[131072]{0}', space=vmem, size = 0x20000, scoped, tag = 'input window, operand 0, single buffered']
    #allocation4 [shape = 's32[1]{0}', space=sflag, size = 0x4, scoped, tag = 'scoped memory for tpu_custom_call.1']
    #allocation5 [shape = 's32[1]{0}', space=sflag, size = 0x4, scoped, tag = 'scoped memory for tpu_custom_call.1']
    #allocation6 [shape = 'u8[6144]{0}', space=vmem, size = 0x1800, scoped, tag = 'input window, operand 1, single buffered']
    #allocation7 [shape = 's32[1]{0}', space=sflag, size = 0x4, scoped, tag = 'scoped memory for tpu_custom_call.1']
    #allocation8 [shape = 'u8[131072]{0}', space=vmem, size = 0x20000, scoped, tag = 'output window, operand 0, single buffered']
    %8 = vsyncpa [#allocation4], 0
    %9 = vsyncpa [#allocation7], 0
    %10 = vsyncpa [#allocation5], 0
    // Predicated region
    $region2: #{tpu_custom_call.1} parent=1 // pred_check
      _
    $region3: #{tpu_custom_call.1} parent=1 // pred_check_branch
      %12 = sbr.rel (0) target = $region5
    $region4: #{tpu_custom_call.1} parent=1 // pred_region
      %s14 = ssub.s32 4096, 4096
      %15 = vsyncadd [#allocation4], %s14
      %s16 = sshll.u32 [#allocation3], 4
      %s17 = int_to_ptr.vmem [resolvable:$true] %s16
      %22 = dma.hbm_to_vmem [thread:$0]  %s0, 4096, %s17, [#allocation4], 128, 128, 8
    $region5: #{tpu_custom_call.1} parent=1 // pred_fallthru
      _
    // Predicated region
    $region6: #{tpu_custom_call.1} parent=1 // pred_check
      _
    $region7: #{tpu_custom_call.1} parent=1 // pred_check_branch
      %24 = sbr.rel (0) target = $region9
    $region8: #{tpu_custom_call.1} parent=1 // pred_region
      %s26 = ssub.s32 192, 192
      %27 = vsyncadd [#allocation7], %s26
      %s28 = sshll.u32 [#allocation6], 4
      %s29 = int_to_ptr.vmem [resolvable:$true] %s28
      %34 = dma.hbm_to_vmem [thread:$0]  %s1, 192, %s29, [#allocation7], 64, 64, 4
    $region9: #{tpu_custom_call.1} parent=1 // pred_fallthru
      _
    // Predicated region
    $region10: #{tpu_custom_call.1} parent=1 // pred_check
      _
    $region11: #{tpu_custom_call.1} parent=1 // pred_check_branch
      %36 = sbr.rel (0) target = $region13
    $region12: #{tpu_custom_call.1} parent=1 // pred_region
      _
    $region13: #{tpu_custom_call.1} parent=1 // pred_fallthru
      _
    // Predicated region
    $region14: #{tpu_custom_call.1} parent=1 // pred_check
      _
    $region15: #{tpu_custom_call.1} parent=1 // pred_check_branch
      %38 = sbr.rel (0) target = $region17
    $region16: #{tpu_custom_call.1} parent=1 // pred_region
      %39 = dma.done [#allocation4], 4096
    $region17: #{tpu_custom_call.1} parent=1 // pred_fallthru
      _
    // Predicated region
    $region18: #{tpu_custom_call.1} parent=1 // pred_check
      _
    $region19: #{tpu_custom_call.1} parent=1 // pred_check_branch
      %41 = sbr.rel (0) target = $region21
    $region20: #{tpu_custom_call.1} parent=1 // pred_region
      %42 = dma.done [#allocation7], 192
    $region21: #{tpu_custom_call.1} parent=1 // pred_fallthru
      _
    %43 = vst [vmem:[#allocation2] sm:$0xff] 0.0
    %44 = vst [vmem:[#allocation2 + $0x8] sm:$0xff] 0.0
    %45 = vst [vmem:[#allocation2 + $0x10] sm:$0x3] 0.0
    %s46 = scalar_lea.vmem [#allocation2], 408
    %47 = vst [vmem:[%s46] sm:$0xff] 0.0
    %48 = vst [vmem:[%s46 + $0x8] sm:$0xff] 0.0
    %49 = vst [vmem:[%s46 + $0x10] sm:$0x3] 0.0
    %s50 = scalar_lea.vmem [#allocation2], 24
    %51 = vst [vmem:[%s50] sm:$0x1] 0.0
    %52 = vst [vmem:[%s50 + $0x18] sm:$0x1] 0.0
    %53 = vst [vmem:[%s50 + $0x30] sm:$0x1] 0.0
    %54 = vst [vmem:[%s50 + $0x48] sm:$0x1] 0.0
    %55 = vst [vmem:[%s50 + $0x60] sm:$0x1] 0.0
    %56 = vst [vmem:[%s50 + $0x78] sm:$0x1] 0.0
    %57 = vst [vmem:[%s50 + $0x90] sm:$0x1] 0.0
    %58 = vst [vmem:[%s50 + $0xa8] sm:$0x1] 0.0
    %59 = vst [vmem:[%s50 + $0xc0] sm:$0x1] 0.0
    %60 = vst [vmem:[%s50 + $0xd8] sm:$0x1] 0.0
    %61 = vst [vmem:[%s50 + $0xf0] sm:$0x1] 0.0
    %62 = vst [vmem:[%s50 + $0x108] sm:$0x1] 0.0
    %63 = vst [vmem:[%s50 + $0x120] sm:$0x1] 0.0
    %64 = vst [vmem:[%s50 + $0x138] sm:$0x1] 0.0
    %65 = vst [vmem:[%s50 + $0x150] sm:$0x1] 0.0
    %66 = vst [vmem:[%s50 + $0x168] sm:$0x1] 0.0
    %67 = vst [vmem:[%s50 + $0x11] sm:$0x1] 0.0
    %68 = vst [vmem:[%s50 + $0x29] sm:$0x1] 0.0
    %69 = vst [vmem:[%s50 + $0x41] sm:$0x1] 0.0
    %70 = vst [vmem:[%s50 + $0x59] sm:$0x1] 0.0
    %71 = vst [vmem:[%s50 + $0x71] sm:$0x1] 0.0
    %72 = vst [vmem:[%s50 + $0x89] sm:$0x1] 0.0
    %73 = vst [vmem:[%s50 + $0xa1] sm:$0x1] 0.0
    %74 = vst [vmem:[%s50 + $0xb9] sm:$0x1] 0.0
    %75 = vst [vmem:[%s50 + $0xd1] sm:$0x1] 0.0
    %76 = vst [vmem:[%s50 + $0xe9] sm:$0x1] 0.0
    %77 = vst [vmem:[%s50 + $0x101] sm:$0x1] 0.0
    %78 = vst [vmem:[%s50 + $0x119] sm:$0x1] 0.0
    %79 = vst [vmem:[%s50 + $0x131] sm:$0x1] 0.0
    %80 = vst [vmem:[%s50 + $0x149] sm:$0x1] 0.0
    %81 = vst [vmem:[%s50 + $0x161] sm:$0x1] 0.0
    %82 = vst [vmem:[%s50 + $0x179] sm:$0x1] 0.0
    %v83 = vld [vmem:[#allocation6] sm:$0x7]
    %v84 = vld [vmem:[#allocation6 + $0x4] sm:$0x7]
    %v85 = vld [vmem:[#allocation6 + $0x8] sm:$0x7]
    %v86 = vld [vmem:[%s2] sm:$0x1]
    %v88 = vlaneseq
    %v89 = vshrl.u32 %v88, 7
    %v90 = vsub.s32 0, %v89
    %v91 = vrot.slane %v86, %v90
    %v93 = vld [vmem:[#allocation3] sm:$0xff]
    %v94 = vld [vmem:[#allocation3 + $0x8] sm:$0xff]
    %v95 = vld [vmem:[#allocation3 + $0x10] sm:$0xff]
    %v96 = vld [vmem:[#allocation3 + $0x18] sm:$0xff]
    %v97 = vld [vmem:[#allocation3 + $0x20] sm:$0xff]
    %v98 = vld [vmem:[#allocation3 + $0x28] sm:$0xff]
    %v99 = vld [vmem:[#allocation3 + $0x30] sm:$0xff]
    %v100 = vld [vmem:[#allocation3 + $0x38] sm:$0xff]
    %v101 = vld [vmem:[#allocation3 + $0x40] sm:$0xff]
    %v102 = vld [vmem:[#allocation3 + $0x48] sm:$0xff]
    %v103 = vld [vmem:[#allocation3 + $0x50] sm:$0xff]
    %v104 = vld [vmem:[#allocation3 + $0x58] sm:$0xff]
    %v105 = vld [vmem:[#allocation3 + $0x60] sm:$0xff]
    %v106 = vld [vmem:[#allocation3 + $0x68] sm:$0xff]
    %v107 = vld [vmem:[#allocation3 + $0x70] sm:$0xff]
    %v108 = vld [vmem:[#allocation3 + $0x78] sm:$0xff]
    %v109 = vld [vmem:[#allocation3 + $0x80] sm:$0xff]
    %v110 = vld [vmem:[#allocation3 + $0x88] sm:$0xff]
    %v111 = vld [vmem:[#allocation3 + $0x90] sm:$0xff]
    %v112 = vld [vmem:[#allocation3 + $0x98] sm:$0xff]
    %v113 = vld [vmem:[#allocation3 + $0xa0] sm:$0xff]
    %v114 = vld [vmem:[#allocation3 + $0xa8] sm:$0xff]
    %v115 = vld [vmem:[#allocation3 + $0xb0] sm:$0xff]
    %v116 = vld [vmem:[#allocation3 + $0xb8] sm:$0xff]
    %v117 = vld [vmem:[#allocation3 + $0xc0] sm:$0xff]
    %v118 = vld [vmem:[#allocation3 + $0xc8] sm:$0xff]
    %v119 = vld [vmem:[#allocation3 + $0xd0] sm:$0xff]
    %v120 = vld [vmem:[#allocation3 + $0xd8] sm:$0xff]
    %v121 = vld [vmem:[#allocation3 + $0xe0] sm:$0xff]
    %v122 = vld [vmem:[#allocation3 + $0xe8] sm:$0xff]
    %v123 = vld [vmem:[#allocation3 + $0xf0] sm:$0xff]
    %v124 = vld [vmem:[#allocation3 + $0xf8] sm:$0xff]
    %125 = vst [vmem:[%s50 + $0x1] sm:$0xff] %v93
    %126 = vst [vmem:[%s50 + $0x9] sm:$0xff] %v94
    %127 = vst [vmem:[%s50 + $0x19] sm:$0xff] %v95
    %128 = vst [vmem:[%s50 + $0x21] sm:$0xff] %v96
    %129 = vst [vmem:[%s50 + $0x31] sm:$0xff] %v97
    %130 = vst [vmem:[%s50 + $0x39] sm:$0xff] %v98
    %131 = vst [vmem:[%s50 + $0x49] sm:$0xff] %v99
    %132 = vst [vmem:[%s50 + $0x51] sm:$0xff] %v100
    %133 = vst [vmem:[%s50 + $0x61] sm:$0xff] %v101
    %134 = vst [vmem:[%s50 + $0x69] sm:$0xff] %v102
    %135 = vst [vmem:[%s50 + $0x79] sm:$0xff] %v103
    %136 = vst [vmem:[%s50 + $0x81] sm:$0xff] %v104
    %137 = vst [vmem:[%s50 + $0x91] sm:$0xff] %v105
    %138 = vst [vmem:[%s50 + $0x99] sm:$0xff] %v106
    %139 = vst [vmem:[%s50 + $0xa9] sm:$0xff] %v107
    %140 = vst [vmem:[%s50 + $0xb1] sm:$0xff] %v108
    %141 = vst [vmem:[%s50 + $0xc1] sm:$0xff] %v109
    %142 = vst [vmem:[%s50 + $0xc9] sm:$0xff] %v110
    %143 = vst [vmem:[%s50 + $0xd9] sm:$0xff] %v111
    %144 = vst [vmem:[%s50 + $0xe1] sm:$0xff] %v112
    %145 = vst [vmem:[%s50 + $0xf1] sm:$0xff] %v113
    %146 = vst [vmem:[%s50 + $0xf9] sm:$0xff] %v114
    %147 = vst [vmem:[%s50 + $0x109] sm:$0xff] %v115
    %148 = vst [vmem:[%s50 + $0x111] sm:$0xff] %v116
    %149 = vst [vmem:[%s50 + $0x121] sm:$0xff] %v117
    %150 = vst [vmem:[%s50 + $0x129] sm:$0xff] %v118
    %151 = vst [vmem:[%s50 + $0x139] sm:$0xff] %v119
    %152 = vst [vmem:[%s50 + $0x141] sm:$0xff] %v120
    %153 = vst [vmem:[%s50 + $0x151] sm:$0xff] %v121
    %154 = vst [vmem:[%s50 + $0x159] sm:$0xff] %v122
    %155 = vst [vmem:[%s50 + $0x169] sm:$0xff] %v123
    %156 = vst [vmem:[%s50 + $0x171] sm:$0xff] %v124
    %v157 = vld [vmem:[#allocation2] sm:$0xff]
    %v158 = vld [vmem:[#allocation2 + $0x8] sm:$0xff]
    %v159 = vld [vmem:[#allocation2 + $0x10] sm:$0x3]
    %v160 = vld [vmem:[#allocation2 + $0x18] sm:$0xff]
    %v161 = vld [vmem:[#allocation2 + $0x20] sm:$0xff]
    %v162 = vld [vmem:[#allocation2 + $0x28] sm:$0x3]
    %v163 = vld [vmem:[#allocation2 + $0x30] sm:$0xff]
    %v164 = vld [vmem:[#allocation2 + $0x38] sm:$0xff]
    %v165 = vld [vmem:[#allocation2 + $0x40] sm:$0x3]
    %v166 = vld [vmem:[#allocation2 + $0x48] sm:$0xff]
    %v167 = vld [vmem:[#allocation2 + $0x50] sm:$0xff]
    %v168 = vld [vmem:[#allocation2 + $0x58] sm:$0x3]
    %v169 = vld [vmem:[#allocation2 + $0x60] sm:$0xff]
    %v170 = vld [vmem:[#allocation2 + $0x68] sm:$0xff]
    %v171 = vld [vmem:[#allocation2 + $0x70] sm:$0x3]
    %v172 = vld [vmem:[#allocation2 + $0x78] sm:$0xff]
    %v173 = vld [vmem:[#allocation2 + $0x80] sm:$0xff]
    %v174 = vld [vmem:[#allocation2 + $0x88] sm:$0x3]
    %v175 = vld [vmem:[#allocation2 + $0x90] sm:$0xff]
    %v176 = vld [vmem:[#allocation2 + $0x98] sm:$0xff]
    %v177 = vld [vmem:[#allocation2 + $0xa0] sm:$0x3]
    %v178 = vld [vmem:[#allocation2 + $0xa8] sm:$0xff]
    %v179 = vld [vmem:[#allocation2 + $0xb0] sm:$0xff]
    %v180 = vld [vmem:[#allocation2 + $0xb8] sm:$0x3]
    %v181 = vld [vmem:[#allocation2 + $0xc0] sm:$0xff]
    %v182 = vld [vmem:[#allocation2 + $0xc8] sm:$0xff]
    %v183 = vld [vmem:[#allocation2 + $0xd0] sm:$0x3]
    %v184 = vld [vmem:[#allocation2 + $0xd8] sm:$0xff]
    %v185 = vld [vmem:[#allocation2 + $0xe0] sm:$0xff]
    %v186 = vld [vmem:[#allocation2 + $0xe8] sm:$0x3]
    %v187 = vlaneseq
    %v188 = vshrl.u32 %v187, 7
    %v189 = vsub.s32 0, %v188
    %v190 = vrot.slane %v83, %v189
    %v191 = vmul.f32 %v157, %v190
    %v192 = vmul.f32 %v158, %v190
    %v193 = vmul.f32 %v160, %v190
    %v194 = vmul.f32 %v161, %v190
    %v195 = vmul.f32 %v163, %v190
    %v196 = vmul.f32 %v164, %v190
    %v197 = vmul.f32 %v166, %v190
    %v198 = vmul.f32 %v167, %v190
    %v199 = vmul.f32 %v169, %v190
    %v200 = vmul.f32 %v170, %v190
    %v201 = vmul.f32 %v172, %v190
    %v202 = vmul.f32 %v173, %v190
    %v203 = vmul.f32 %v175, %v190
    %v204 = vmul.f32 %v176, %v190
    %v205 = vmul.f32 %v178, %v190
    %v206 = vmul.f32 %v179, %v190
    %v207 = vadd.f32 %v91, %v191
    %v208 = vadd.f32 %v91, %v192
    %v209 = vadd.f32 %v91, %v193
    %v210 = vadd.f32 %v91, %v194
    %v211 = vadd.f32 %v91, %v195
    %v212 = vadd.f32 %v91, %v196
    %v213 = vadd.f32 %v91, %v197
    %v214 = vadd.f32 %v91, %v198
    %v215 = vadd.f32 %v91, %v199
    %v216 = vadd.f32 %v91, %v200
    %v217 = vadd.f32 %v91, %v201
    %v218 = vadd.f32 %v91, %v202
    %v219 = vadd.f32 %v91, %v203
    %v220 = vadd.f32 %v91, %v204
    %v221 = vadd.f32 %v91, %v205
    %v222 = vadd.f32 %v91, %v206
    %v223 = vlaneseq
    %v224 = vshrl.u32 %v223, 7
    %v225 = vsub.s32 0, %v224
    %v226 = vrot.slane %v84, %v225
    %v227 = vmul.f32 %v160, %v226
    %v228 = vmul.f32 %v161, %v226
    %v229 = vmul.f32 %v163, %v226
    %v230 = vmul.f32 %v164, %v226
    %v231 = vmul.f32 %v166, %v226
    %v232 = vmul.f32 %v167, %v226
    %v233 = vmul.f32 %v169, %v226
    %v234 = vmul.f32 %v170, %v226
    %v235 = vmul.f32 %v172, %v226
    %v236 = vmul.f32 %v173, %v226
    %v237 = vmul.f32 %v175, %v226
    %v238 = vmul.f32 %v176, %v226
    %v239 = vmul.f32 %v178, %v226
    %v240 = vmul.f32 %v179, %v226
    %v241 = vmul.f32 %v181, %v226
    %v242 = vmul.f32 %v182, %v226
    %v243 = vadd.f32 %v207, %v227
    %v244 = vadd.f32 %v208, %v228
    %v245 = vadd.f32 %v209, %v229
    %v246 = vadd.f32 %v210, %v230
    %v247 = vadd.f32 %v211, %v231
    %v248 = vadd.f32 %v212, %v232
    %v249 = vadd.f32 %v213, %v233
    %v250 = vadd.f32 %v214, %v234
    %v251 = vadd.f32 %v215, %v235
    %v252 = vadd.f32 %v216, %v236
    %v253 = vadd.f32 %v217, %v237
    %v254 = vadd.f32 %v218, %v238
    %v255 = vadd.f32 %v219, %v239
    %v256 = vadd.f32 %v220, %v240
    %v257 = vadd.f32 %v221, %v241
    %v258 = vadd.f32 %v222, %v242
    %v259 = vlaneseq
    %v260 = vshrl.u32 %v259, 7
    %v261 = vsub.s32 0, %v260
    %v262 = vrot.slane %v85, %v261
    %v263 = vmul.f32 %v163, %v262
    %v264 = vmul.f32 %v164, %v262
    %v265 = vmul.f32 %v166, %v262
    %v266 = vmul.f32 %v167, %v262
    %v267 = vmul.f32 %v169, %v262
    %v268 = vmul.f32 %v170, %v262
    %v269 = vmul.f32 %v172, %v262
    %v270 = vmul.f32 %v173, %v262
    %v271 = vmul.f32 %v175, %v262
    %v272 = vmul.f32 %v176, %v262
    %v273 = vmul.f32 %v178, %v262
    %v274 = vmul.f32 %v179, %v262
    %v275 = vmul.f32 %v181, %v262
    %v276 = vmul.f32 %v182, %v262
    %v277 = vmul.f32 %v184, %v262
    %v278 = vmul.f32 %v185, %v262
    %v279 = vadd.f32 %v243, %v263
    %v280 = vadd.f32 %v244, %v264
    %v281 = vadd.f32 %v245, %v265
    %v282 = vadd.f32 %v246, %v266
    %v283 = vadd.f32 %v247, %v267
    %v284 = vadd.f32 %v248, %v268
    %v285 = vadd.f32 %v249, %v269
    %v286 = vadd.f32 %v250, %v270
    %v287 = vadd.f32 %v251, %v271
    %v288 = vadd.f32 %v252, %v272
    %v289 = vadd.f32 %v253, %v273
    %v290 = vadd.f32 %v254, %v274
    %v291 = vadd.f32 %v255, %v275
    %v292 = vadd.f32 %v256, %v276
    %v293 = vadd.f32 %v257, %v277
    %v294 = vadd.f32 %v258, %v278
    %v295 = vlaneseq
    %v296 = vshrl.u32 %v295, 7
    %v297 = vsub.s32 1, %v296
    %v298 = vrot.slane %v83, %v297
    %v299 = vmul.f32 %v157, %v298
    %v300 = vmul.f32 %v158, %v298
    %v301 = vmul.f32 %v159, %v298
    %v302 = vmul.f32 %v160, %v298
    %v303 = vmul.f32 %v161, %v298
    %v304 = vmul.f32 %v162, %v298
    %v305 = vmul.f32 %v163, %v298
    %v306 = vmul.f32 %v164, %v298
    %v307 = vmul.f32 %v165, %v298
    %v308 = vmul.f32 %v166, %v298
    %v309 = vmul.f32 %v167, %v298
    %v310 = vmul.f32 %v168, %v298
    %v311 = vmul.f32 %v169, %v298
    %v312 = vmul.f32 %v170, %v298
    %v313 = vmul.f32 %v171, %v298
    %v314 = vmul.f32 %v172, %v298
    %v315 = vmul.f32 %v173, %v298
    %v316 = vmul.f32 %v174, %v298
    %v317 = vmul.f32 %v175, %v298
    %v318 = vmul.f32 %v176, %v298
    %v319 = vmul.f32 %v177, %v298
    %v320 = vmul.f32 %v178, %v298
    %v321 = vmul.f32 %v179, %v298
    %v322 = vmul.f32 %v180, %v298
    %vm347 = vcmask 1046528
    %v348 = vrot.slane %v299, 1
    %v349 = vrot.slane %v300, 1
    %v350 = vsel %vm347, %v348, %v349
    %v351 = vrot.slane %v301, 1
    %v352 = vsel %vm347, %v349, %v351
    %v353 = vrot.slane %v302, 1
    %v354 = vrot.slane %v303, 1
    %v355 = vsel %vm347, %v353, %v354
    %v356 = vrot.slane %v304, 1
    %v357 = vsel %vm347, %v354, %v356
    %v358 = vrot.slane %v305, 1
    %v359 = vrot.slane %v306, 1
    %v360 = vsel %vm347, %v358, %v359
    %v361 = vrot.slane %v307, 1
    %v362 = vsel %vm347, %v359, %v361
    %v363 = vrot.slane %v308, 1
    %v364 = vrot.slane %v309, 1
    %v365 = vsel %vm347, %v363, %v364
    %v366 = vrot.slane %v310, 1
    %v367 = vsel %vm347, %v364, %v366
    %v368 = vrot.slane %v311, 1
    %v369 = vrot.slane %v312, 1
    %v370 = vsel %vm347, %v368, %v369
    %v371 = vrot.slane %v313, 1
    %v372 = vsel %vm347, %v369, %v371
    %v373 = vrot.slane %v314, 1
    %v374 = vrot.slane %v315, 1
    %v375 = vsel %vm347, %v373, %v374
    %v376 = vrot.slane %v316, 1
    %v377 = vsel %vm347, %v374, %v376
    %v378 = vrot.slane %v317, 1
    %v379 = vrot.slane %v318, 1
    %v380 = vsel %vm347, %v378, %v379
    %v381 = vrot.slane %v319, 1
    %v382 = vsel %vm347, %v379, %v381
    %v383 = vrot.slane %v320, 1
    %v384 = vrot.slane %v321, 1
    %v385 = vsel %vm347, %v383, %v384
    %v386 = vrot.slane %v322, 1
    %v387 = vsel %vm347, %v384, %v386
    %v404 = vadd.f32 %v279, %v350
    %v405 = vadd.f32 %v280, %v352
    %v406 = vadd.f32 %v281, %v355
    %v407 = vadd.f32 %v282, %v357
    %v408 = vadd.f32 %v283, %v360
    %v409 = vadd.f32 %v284, %v362
    %v410 = vadd.f32 %v285, %v365
    %v411 = vadd.f32 %v286, %v367
    %v412 = vadd.f32 %v287, %v370
    %v413 = vadd.f32 %v288, %v372
    %v414 = vadd.f32 %v289, %v375
    %v415 = vadd.f32 %v290, %v377
    %v416 = vadd.f32 %v291, %v380
    %v417 = vadd.f32 %v292, %v382
    %v418 = vadd.f32 %v293, %v385
    %v419 = vadd.f32 %v294, %v387
    %v420 = vlaneseq
    %v421 = vshrl.u32 %v420, 7
    %v422 = vsub.s32 1, %v421
    %v423 = vrot.slane %v84, %v422
    %v424 = vmul.f32 %v160, %v423
    %v425 = vmul.f32 %v161, %v423
    %v426 = vmul.f32 %v162, %v423
    %v427 = vmul.f32 %v163, %v423
    %v428 = vmul.f32 %v164, %v423
    %v429 = vmul.f32 %v165, %v423
    %v430 = vmul.f32 %v166, %v423
    %v431 = vmul.f32 %v167, %v423
    %v432 = vmul.f32 %v168, %v423
    %v433 = vmul.f32 %v169, %v423
    %v434 = vmul.f32 %v170, %v423
    %v435 = vmul.f32 %v171, %v423
    %v436 = vmul.f32 %v172, %v423
    %v437 = vmul.f32 %v173, %v423
    %v438 = vmul.f32 %v174, %v423
    %v439 = vmul.f32 %v175, %v423
    %v440 = vmul.f32 %v176, %v423
    %v441 = vmul.f32 %v177, %v423
    %v442 = vmul.f32 %v178, %v423
    %v443 = vmul.f32 %v179, %v423
    %v444 = vmul.f32 %v180, %v423
    %v445 = vmul.f32 %v181, %v423
    %v446 = vmul.f32 %v182, %v423
    %v447 = vmul.f32 %v183, %v423
    %v472 = vrot.slane %v424, 1
    %v473 = vrot.slane %v425, 1
    %v474 = vsel %vm347, %v472, %v473
    %v475 = vrot.slane %v426, 1
    %v476 = vsel %vm347, %v473, %v475
    %v477 = vrot.slane %v427, 1
    %v478 = vrot.slane %v428, 1
    %v479 = vsel %vm347, %v477, %v478
    %v480 = vrot.slane %v429, 1
    %v481 = vsel %vm347, %v478, %v480
    %v482 = vrot.slane %v430, 1
    %v483 = vrot.slane %v431, 1
    %v484 = vsel %vm347, %v482, %v483
    %v485 = vrot.slane %v432, 1
    %v486 = vsel %vm347, %v483, %v485
    %v487 = vrot.slane %v433, 1
    %v488 = vrot.slane %v434, 1
    %v489 = vsel %vm347, %v487, %v488
    %v490 = vrot.slane %v435, 1
    %v491 = vsel %vm347, %v488, %v490
    %v492 = vrot.slane %v436, 1
    %v493 = vrot.slane %v437, 1
    %v494 = vsel %vm347, %v492, %v493
    %v495 = vrot.slane %v438, 1
    %v496 = vsel %vm347, %v493, %v495
    %v497 = vrot.slane %v439, 1
    %v498 = vrot.slane %v440, 1
    %v499 = vsel %vm347, %v497, %v498
    %v500 = vrot.slane %v441, 1
    %v501 = vsel %vm347, %v498, %v500
    %v502 = vrot.slane %v442, 1
    %v503 = vrot.slane %v443, 1
    %v504 = vsel %vm347, %v502, %v503
    %v505 = vrot.slane %v444, 1
    %v506 = vsel %vm347, %v503, %v505
    %v507 = vrot.slane %v445, 1
    %v508 = vrot.slane %v446, 1
    %v509 = vsel %vm347, %v507, %v508
    %v510 = vrot.slane %v447, 1
    %v511 = vsel %vm347, %v508, %v510
    %v528 = vadd.f32 %v404, %v474
    %v529 = vadd.f32 %v405, %v476
    %v530 = vadd.f32 %v406, %v479
    %v531 = vadd.f32 %v407, %v481
    %v532 = vadd.f32 %v408, %v484
    %v533 = vadd.f32 %v409, %v486
    %v534 = vadd.f32 %v410, %v489
    %v535 = vadd.f32 %v411, %v491
    %v536 = vadd.f32 %v412, %v494
    %v537 = vadd.f32 %v413, %v496
    %v538 = vadd.f32 %v414, %v499
    %v539 = vadd.f32 %v415, %v501
    %v540 = vadd.f32 %v416, %v504
    %v541 = vadd.f32 %v417, %v506
    %v542 = vadd.f32 %v418, %v509
    %v543 = vadd.f32 %v419, %v511
    %v544 = vlaneseq
    %v545 = vshrl.u32 %v544, 7
    %v546 = vsub.s32 1, %v545
    %v547 = vrot.slane %v85, %v546
    %v548 = vmul.f32 %v163, %v547
    %v549 = vmul.f32 %v164, %v547
    %v550 = vmul.f32 %v165, %v547
    %v551 = vmul.f32 %v166, %v547
    %v552 = vmul.f32 %v167, %v547
    %v553 = vmul.f32 %v168, %v547
    %v554 = vmul.f32 %v169, %v547
    %v555 = vmul.f32 %v170, %v547
    %v556 = vmul.f32 %v171, %v547
    %v557 = vmul.f32 %v172, %v547
    %v558 = vmul.f32 %v173, %v547
    %v559 = vmul.f32 %v174, %v547
    %v560 = vmul.f32 %v175, %v547
    %v561 = vmul.f32 %v176, %v547
    %v562 = vmul.f32 %v177, %v547
    %v563 = vmul.f32 %v178, %v547
    %v564 = vmul.f32 %v179, %v547
    %v565 = vmul.f32 %v180, %v547
    %v566 = vmul.f32 %v181, %v547
    %v567 = vmul.f32 %v182, %v547
    %v568 = vmul.f32 %v183, %v547
    %v569 = vmul.f32 %v184, %v547
    %v570 = vmul.f32 %v185, %v547
    %v571 = vmul.f32 %v186, %v547
    %v596 = vrot.slane %v548, 1
    %v597 = vrot.slane %v549, 1
    %v598 = vsel %vm347, %v596, %v597
    %v599 = vrot.slane %v550, 1
    %v600 = vsel %vm347, %v597, %v599
    %v601 = vrot.slane %v551, 1
    %v602 = vrot.slane %v552, 1
    %v603 = vsel %vm347, %v601, %v602
    %v604 = vrot.slane %v553, 1
    %v605 = vsel %vm347, %v602, %v604
    %v606 = vrot.slane %v554, 1
    %v607 = vrot.slane %v555, 1
    %v608 = vsel %vm347, %v606, %v607
    %v609 = vrot.slane %v556, 1
    %v610 = vsel %vm347, %v607, %v609
    %v611 = vrot.slane %v557, 1
    %v612 = vrot.slane %v558, 1
    %v613 = vsel %vm347, %v611, %v612
    %v614 = vrot.slane %v559, 1
    %v615 = vsel %vm347, %v612, %v614
    %v616 = vrot.slane %v560, 1
    %v617 = vrot.slane %v561, 1
    %v618 = vsel %vm347, %v616, %v617
    %v619 = vrot.slane %v562, 1
    %v620 = vsel %vm347, %v617, %v619
    %v621 = vrot.slane %v563, 1
    %v622 = vrot.slane %v564, 1
    %v623 = vsel %vm347, %v621, %v622
    %v624 = vrot.slane %v565, 1
    %v625 = vsel %vm347, %v622, %v624
    %v626 = vrot.slane %v566, 1
    %v627 = vrot.slane %v567, 1
    %v628 = vsel %vm347, %v626, %v627
    %v629 = vrot.slane %v568, 1
    %v630 = vsel %vm347, %v627, %v629
    %v631 = vrot.slane %v569, 1
    %v632 = vrot.slane %v570, 1
    %v633 = vsel %vm347, %v631, %v632
    %v634 = vrot.slane %v571, 1
    %v635 = vsel %vm347, %v632, %v634
    %v652 = vadd.f32 %v528, %v598
    %v653 = vadd.f32 %v529, %v600
    %v654 = vadd.f32 %v530, %v603
    %v655 = vadd.f32 %v531, %v605
    %v656 = vadd.f32 %v532, %v608
    %v657 = vadd.f32 %v533, %v610
    %v658 = vadd.f32 %v534, %v613
    %v659 = vadd.f32 %v535, %v615
    %v660 = vadd.f32 %v536, %v618
    %v661 = vadd.f32 %v537, %v620
    %v662 = vadd.f32 %v538, %v623
    %v663 = vadd.f32 %v539, %v625
    %v664 = vadd.f32 %v540, %v628
    %v665 = vadd.f32 %v541, %v630
    %v666 = vadd.f32 %v542, %v633
    %v667 = vadd.f32 %v543, %v635
    %v668 = vlaneseq
    %v669 = vshrl.u32 %v668, 7
    %v670 = vsub.s32 2, %v669
    %v671 = vrot.slane %v83, %v670
    %v672 = vmul.f32 %v157, %v671
    %v673 = vmul.f32 %v158, %v671
    %v674 = vmul.f32 %v159, %v671
    %v675 = vmul.f32 %v160, %v671
    %v676 = vmul.f32 %v161, %v671
    %v677 = vmul.f32 %v162, %v671
    %v678 = vmul.f32 %v163, %v671
    %v679 = vmul.f32 %v164, %v671
    %v680 = vmul.f32 %v165, %v671
    %v681 = vmul.f32 %v166, %v671
    %v682 = vmul.f32 %v167, %v671
    %v683 = vmul.f32 %v168, %v671
    %v684 = vmul.f32 %v169, %v671
    %v685 = vmul.f32 %v170, %v671
    %v686 = vmul.f32 %v171, %v671
    %v687 = vmul.f32 %v172, %v671
    %v688 = vmul.f32 %v173, %v671
    %v689 = vmul.f32 %v174, %v671
    %v690 = vmul.f32 %v175, %v671
    %v691 = vmul.f32 %v176, %v671
    %v692 = vmul.f32 %v177, %v671
    %v693 = vmul.f32 %v178, %v671
    %v694 = vmul.f32 %v179, %v671
    %v695 = vmul.f32 %v180, %v671
    %vm720 = vcmask 1045504
    %v721 = vrot.slane %v672, 2
    %v722 = vrot.slane %v673, 2
    %v723 = vsel %vm720, %v721, %v722
    %v724 = vrot.slane %v674, 2
    %v725 = vsel %vm720, %v722, %v724
    %v726 = vrot.slane %v675, 2
    %v727 = vrot.slane %v676, 2
    %v728 = vsel %vm720, %v726, %v727
    %v729 = vrot.slane %v677, 2
    %v730 = vsel %vm720, %v727, %v729
    %v731 = vrot.slane %v678, 2
    %v732 = vrot.slane %v679, 2
    %v733 = vsel %vm720, %v731, %v732
    %v734 = vrot.slane %v680, 2
    %v735 = vsel %vm720, %v732, %v734
    %v736 = vrot.slane %v681, 2
    %v737 = vrot.slane %v682, 2
    %v738 = vsel %vm720, %v736, %v737
    %v739 = vrot.slane %v683, 2
    %v740 = vsel %vm720, %v737, %v739
    %v741 = vrot.slane %v684, 2
    %v742 = vrot.slane %v685, 2
    %v743 = vsel %vm720, %v741, %v742
    %v744 = vrot.slane %v686, 2
    %v745 = vsel %vm720, %v742, %v744
    %v746 = vrot.slane %v687, 2
    %v747 = vrot.slane %v688, 2
    %v748 = vsel %vm720, %v746, %v747
    %v749 = vrot.slane %v689, 2
    %v750 = vsel %vm720, %v747, %v749
    %v751 = vrot.slane %v690, 2
    %v752 = vrot.slane %v691, 2
    %v753 = vsel %vm720, %v751, %v752
    %v754 = vrot.slane %v692, 2
    %v755 = vsel %vm720, %v752, %v754
    %v756 = vrot.slane %v693, 2
    %v757 = vrot.slane %v694, 2
    %v758 = vsel %vm720, %v756, %v757
    %v759 = vrot.slane %v695, 2
    %v760 = vsel %vm720, %v757, %v759
    %v777 = vadd.f32 %v652, %v723
    %v778 = vadd.f32 %v653, %v725
    %v779 = vadd.f32 %v654, %v728
    %v780 = vadd.f32 %v655, %v730
    %v781 = vadd.f32 %v656, %v733
    %v782 = vadd.f32 %v657, %v735
    %v783 = vadd.f32 %v658, %v738
    %v784 = vadd.f32 %v659, %v740
    %v785 = vadd.f32 %v660, %v743
    %v786 = vadd.f32 %v661, %v745
    %v787 = vadd.f32 %v662, %v748
    %v788 = vadd.f32 %v663, %v750
    %v789 = vadd.f32 %v664, %v753
    %v790 = vadd.f32 %v665, %v755
    %v791 = vadd.f32 %v666, %v758
    %v792 = vadd.f32 %v667, %v760
    %v793 = vlaneseq
    %v794 = vshrl.u32 %v793, 7
    %v795 = vsub.s32 2, %v794
    %v796 = vrot.slane %v84, %v795
    %v797 = vmul.f32 %v160, %v796
    %v798 = vmul.f32 %v161, %v796
    %v799 = vmul.f32 %v162, %v796
    %v800 = vmul.f32 %v163, %v796
    %v801 = vmul.f32 %v164, %v796
    %v802 = vmul.f32 %v165, %v796
    %v803 = vmul.f32 %v166, %v796
    %v804 = vmul.f32 %v167, %v796
    %v805 = vmul.f32 %v168, %v796
    %v806 = vmul.f32 %v169, %v796
    %v807 = vmul.f32 %v170, %v796
    %v808 = vmul.f32 %v171, %v796
    %v809 = vmul.f32 %v172, %v796
    %v810 = vmul.f32 %v173, %v796
    %v811 = vmul.f32 %v174, %v796
    %v812 = vmul.f32 %v175, %v796
    %v813 = vmul.f32 %v176, %v796
    %v814 = vmul.f32 %v177, %v796
    %v815 = vmul.f32 %v178, %v796
    %v816 = vmul.f32 %v179, %v796
    %v817 = vmul.f32 %v180, %v796
    %v818 = vmul.f32 %v181, %v796
    %v819 = vmul.f32 %v182, %v796
    %v820 = vmul.f32 %v183, %v796
    %v845 = vrot.slane %v797, 2
    %v846 = vrot.slane %v798, 2
    %v847 = vsel %vm720, %v845, %v846
    %v848 = vrot.slane %v799, 2
    %v849 = vsel %vm720, %v846, %v848
    %v850 = vrot.slane %v800, 2
    %v851 = vrot.slane %v801, 2
    %v852 = vsel %vm720, %v850, %v851
    %v853 = vrot.slane %v802, 2
    %v854 = vsel %vm720, %v851, %v853
    %v855 = vrot.slane %v803, 2
    %v856 = vrot.slane %v804, 2
    %v857 = vsel %vm720, %v855, %v856
    %v858 = vrot.slane %v805, 2
    %v859 = vsel %vm720, %v856, %v858
    %v860 = vrot.slane %v806, 2
    %v861 = vrot.slane %v807, 2
    %v862 = vsel %vm720, %v860, %v861
    %v863 = vrot.slane %v808, 2
    %v864 = vsel %vm720, %v861, %v863
    %v865 = vrot.slane %v809, 2
    %v866 = vrot.slane %v810, 2
    %v867 = vsel %vm720, %v865, %v866
    %v868 = vrot.slane %v811, 2
    %v869 = vsel %vm720, %v866, %v868
    %v870 = vrot.slane %v812, 2
    %v871 = vrot.slane %v813, 2
    %v872 = vsel %vm720, %v870, %v871
    %v873 = vrot.slane %v814, 2
    %v874 = vsel %vm720, %v871, %v873
    %v875 = vrot.slane %v815, 2
    %v876 = vrot.slane %v816, 2
    %v877 = vsel %vm720, %v875, %v876
    %v878 = vrot.slane %v817, 2
    %v879 = vsel %vm720, %v876, %v878
    %v880 = vrot.slane %v818, 2
    %v881 = vrot.slane %v819, 2
    %v882 = vsel %vm720, %v880, %v881
    %v883 = vrot.slane %v820, 2
    %v884 = vsel %vm720, %v881, %v883
    %v901 = vadd.f32 %v777, %v847
    %v902 = vadd.f32 %v778, %v849
    %v903 = vadd.f32 %v779, %v852
    %v904 = vadd.f32 %v780, %v854
    %v905 = vadd.f32 %v781, %v857
    %v906 = vadd.f32 %v782, %v859
    %v907 = vadd.f32 %v783, %v862
    %v908 = vadd.f32 %v784, %v864
    %v909 = vadd.f32 %v785, %v867
    %v910 = vadd.f32 %v786, %v869
    %v911 = vadd.f32 %v787, %v872
    %v912 = vadd.f32 %v788, %v874
    %v913 = vadd.f32 %v789, %v877
    %v914 = vadd.f32 %v790, %v879
    %v915 = vadd.f32 %v791, %v882
    %v916 = vadd.f32 %v792, %v884
    %v917 = vlaneseq
    %v918 = vshrl.u32 %v917, 7
    %v919 = vsub.s32 2, %v918
    %v920 = vrot.slane %v85, %v919
    %v921 = vmul.f32 %v163, %v920
    %v922 = vmul.f32 %v164, %v920
    %v923 = vmul.f32 %v165, %v920
    %v924 = vmul.f32 %v166, %v920
    %v925 = vmul.f32 %v167, %v920
    %v926 = vmul.f32 %v168, %v920
    %v927 = vmul.f32 %v169, %v920
    %v928 = vmul.f32 %v170, %v920
    %v929 = vmul.f32 %v171, %v920
    %v930 = vmul.f32 %v172, %v920
    %v931 = vmul.f32 %v173, %v920
    %v932 = vmul.f32 %v174, %v920
    %v933 = vmul.f32 %v175, %v920
    %v934 = vmul.f32 %v176, %v920
    %v935 = vmul.f32 %v177, %v920
    %v936 = vmul.f32 %v178, %v920
    %v937 = vmul.f32 %v179, %v920
    %v938 = vmul.f32 %v180, %v920
    %v939 = vmul.f32 %v181, %v920
    %v940 = vmul.f32 %v182, %v920
    %v941 = vmul.f32 %v183, %v920
    %v942 = vmul.f32 %v184, %v920
    %v943 = vmul.f32 %v185, %v920
    %v944 = vmul.f32 %v186, %v920
    %v969 = vrot.slane %v921, 2
    %v970 = vrot.slane %v922, 2
    %v971 = vsel %vm720, %v969, %v970
    %v972 = vrot.slane %v923, 2
    %v973 = vsel %vm720, %v970, %v972
    %v974 = vrot.slane %v924, 2
    %v975 = vrot.slane %v925, 2
    %v976 = vsel %vm720, %v974, %v975
    %v977 = vrot.slane %v926, 2
    %v978 = vsel %vm720, %v975, %v977
    %v979 = vrot.slane %v927, 2
    %v980 = vrot.slane %v928, 2
    %v981 = vsel %vm720, %v979, %v980
    %v982 = vrot.slane %v929, 2
    %v983 = vsel %vm720, %v980, %v982
    %v984 = vrot.slane %v930, 2
    %v985 = vrot.slane %v931, 2
    %v986 = vsel %vm720, %v984, %v985
    %v987 = vrot.slane %v932, 2
    %v988 = vsel %vm720, %v985, %v987
    %v989 = vrot.slane %v933, 2
    %v990 = vrot.slane %v934, 2
    %v991 = vsel %vm720, %v989, %v990
    %v992 = vrot.slane %v935, 2
    %v993 = vsel %vm720, %v990, %v992
    %v994 = vrot.slane %v936, 2
    %v995 = vrot.slane %v937, 2
    %v996 = vsel %vm720, %v994, %v995
    %v997 = vrot.slane %v938, 2
    %v998 = vsel %vm720, %v995, %v997
    %v999 = vrot.slane %v939, 2
    %v1000 = vrot.slane %v940, 2
    %v1001 = vsel %vm720, %v999, %v1000
    %v1002 = vrot.slane %v941, 2
    %v1003 = vsel %vm720, %v1000, %v1002
    %v1004 = vrot.slane %v942, 2
    %v1005 = vrot.slane %v943, 2
    %v1006 = vsel %vm720, %v1004, %v1005
    %v1007 = vrot.slane %v944, 2
    %v1008 = vsel %vm720, %v1005, %v1007
    %v1025 = vadd.f32 %v901, %v971
    %v1026 = vadd.f32 %v902, %v973
    %v1027 = vadd.f32 %v903, %v976
    %v1028 = vadd.f32 %v904, %v978
    %v1029 = vadd.f32 %v905, %v981
    %v1030 = vadd.f32 %v906, %v983
    %v1031 = vadd.f32 %v907, %v986
    %v1032 = vadd.f32 %v908, %v988
    %v1033 = vadd.f32 %v909, %v991
    %v1034 = vadd.f32 %v910, %v993
    %v1035 = vadd.f32 %v911, %v996
    %v1036 = vadd.f32 %v912, %v998
    %v1037 = vadd.f32 %v913, %v1001
    %v1038 = vadd.f32 %v914, %v1003
    %v1039 = vadd.f32 %v915, %v1006
    %v1040 = vadd.f32 %v916, %v1008
    %v1041 = vmax.f32 %v1025, 0.0
    %v1042 = vmax.f32 %v1026, 0.0
    %v1043 = vmax.f32 %v1027, 0.0
    %v1044 = vmax.f32 %v1028, 0.0
    %v1045 = vmax.f32 %v1029, 0.0
    %v1046 = vmax.f32 %v1030, 0.0
    %v1047 = vmax.f32 %v1031, 0.0
    %v1048 = vmax.f32 %v1032, 0.0
    %v1049 = vmax.f32 %v1033, 0.0
    %v1050 = vmax.f32 %v1034, 0.0
    %v1051 = vmax.f32 %v1035, 0.0
    %v1052 = vmax.f32 %v1036, 0.0
    %v1053 = vmax.f32 %v1037, 0.0
    %v1054 = vmax.f32 %v1038, 0.0
    %v1055 = vmax.f32 %v1039, 0.0
    %v1056 = vmax.f32 %v1040, 0.0
    %v1057 = vmin.f32 %v1041, 6.0
    %v1058 = vmin.f32 %v1042, 6.0
    %v1059 = vmin.f32 %v1043, 6.0
    %v1060 = vmin.f32 %v1044, 6.0
    %v1061 = vmin.f32 %v1045, 6.0
    %v1062 = vmin.f32 %v1046, 6.0
    %v1063 = vmin.f32 %v1047, 6.0
    %v1064 = vmin.f32 %v1048, 6.0
    %v1065 = vmin.f32 %v1049, 6.0
    %v1066 = vmin.f32 %v1050, 6.0
    %v1067 = vmin.f32 %v1051, 6.0
    %v1068 = vmin.f32 %v1052, 6.0
    %v1069 = vmin.f32 %v1053, 6.0
    %v1070 = vmin.f32 %v1054, 6.0
    %v1071 = vmin.f32 %v1055, 6.0
    %v1072 = vmin.f32 %v1056, 6.0
    %1073 = vst [vmem:[#allocation8] sm:$0xff] %v1057
    %1074 = vst [vmem:[#allocation8 + $0x8] sm:$0xff] %v1058
    %1075 = vst [vmem:[#allocation8 + $0x10] sm:$0xff] %v1059
    %1076 = vst [vmem:[#allocation8 + $0x18] sm:$0xff] %v1060
    %1077 = vst [vmem:[#allocation8 + $0x20] sm:$0xff] %v1061
    %1078 = vst [vmem:[#allocation8 + $0x28] sm:$0xff] %v1062
    %1079 = vst [vmem:[#allocation8 + $0x30] sm:$0xff] %v1063
    %1080 = vst [vmem:[#allocation8 + $0x38] sm:$0xff] %v1064
    %1081 = vst [vmem:[#allocation8 + $0x40] sm:$0xff] %v1065
    %1082 = vst [vmem:[#allocation8 + $0x48] sm:$0xff] %v1066
    %1083 = vst [vmem:[#allocation8 + $0x50] sm:$0xff] %v1067
    %1084 = vst [vmem:[#allocation8 + $0x58] sm:$0xff] %v1068
    %1085 = vst [vmem:[#allocation8 + $0x60] sm:$0xff] %v1069
    %1086 = vst [vmem:[#allocation8 + $0x68] sm:$0xff] %v1070
    %1087 = vst [vmem:[#allocation8 + $0x70] sm:$0xff] %v1071
    %1088 = vst [vmem:[#allocation8 + $0x78] sm:$0xff] %v1072
    %s1089 = scalar_lea.vmem [#allocation2], 192
    %v1090 = vld [vmem:[%s1089] sm:$0xff]
    %v1091 = vld [vmem:[%s1089 + $0x8] sm:$0xff]
    %v1092 = vld [vmem:[%s1089 + $0x10] sm:$0x3]
    %v1093 = vld [vmem:[%s1089 + $0x18] sm:$0xff]
    %v1094 = vld [vmem:[%s1089 + $0x20] sm:$0xff]
    %v1095 = vld [vmem:[%s1089 + $0x28] sm:$0x3]
    %v1096 = vld [vmem:[%s1089 + $0x30] sm:$0xff]
    %v1097 = vld [vmem:[%s1089 + $0x38] sm:$0xff]
    %v1098 = vld [vmem:[%s1089 + $0x40] sm:$0x3]
    %v1099 = vld [vmem:[%s1089 + $0x48] sm:$0xff]
    %v1100 = vld [vmem:[%s1089 + $0x50] sm:$0xff]
    %v1101 = vld [vmem:[%s1089 + $0x58] sm:$0x3]
    %v1102 = vld [vmem:[%s1089 + $0x60] sm:$0xff]
    %v1103 = vld [vmem:[%s1089 + $0x68] sm:$0xff]
    %v1104 = vld [vmem:[%s1089 + $0x70] sm:$0x3]
    %v1105 = vld [vmem:[%s1089 + $0x78] sm:$0xff]
    %v1106 = vld [vmem:[%s1089 + $0x80] sm:$0xff]
    %v1107 = vld [vmem:[%s1089 + $0x88] sm:$0x3]
    %v1108 = vld [vmem:[%s1089 + $0x90] sm:$0xff]
    %v1109 = vld [vmem:[%s1089 + $0x98] sm:$0xff]
    %v1110 = vld [vmem:[%s1089 + $0xa0] sm:$0x3]
    %v1111 = vld [vmem:[%s1089 + $0xa8] sm:$0xff]
    %v1112 = vld [vmem:[%s1089 + $0xb0] sm:$0xff]
    %v1113 = vld [vmem:[%s1089 + $0xb8] sm:$0x3]
    %v1114 = vld [vmem:[%s1089 + $0xc0] sm:$0xff]
    %v1115 = vld [vmem:[%s1089 + $0xc8] sm:$0xff]
    %v1116 = vld [vmem:[%s1089 + $0xd0] sm:$0x3]
    %v1117 = vld [vmem:[%s1089 + $0xd8] sm:$0xff]
    %v1118 = vld [vmem:[%s1089 + $0xe0] sm:$0xff]
    %v1119 = vld [vmem:[%s1089 + $0xe8] sm:$0x3]
    %v1120 = vmul.f32 %v1090, %v190
    %v1121 = vmul.f32 %v1091, %v190
    %v1122 = vmul.f32 %v1093, %v190
    %v1123 = vmul.f32 %v1094, %v190
    %v1124 = vmul.f32 %v1096, %v190
    %v1125 = vmul.f32 %v1097, %v190
    %v1126 = vmul.f32 %v1099, %v190
    %v1127 = vmul.f32 %v1100, %v190
    %v1128 = vmul.f32 %v1102, %v190
    %v1129 = vmul.f32 %v1103, %v190
    %v1130 = vmul.f32 %v1105, %v190
    %v1131 = vmul.f32 %v1106, %v190
    %v1132 = vmul.f32 %v1108, %v190
    %v1133 = vmul.f32 %v1109, %v190
    %v1134 = vmul.f32 %v1111, %v190
    %v1135 = vmul.f32 %v1112, %v190
    %v1136 = vadd.f32 %v91, %v1120
    %v1137 = vadd.f32 %v91, %v1121
    %v1138 = vadd.f32 %v91, %v1122
    %v1139 = vadd.f32 %v91, %v1123
    %v1140 = vadd.f32 %v91, %v1124
    %v1141 = vadd.f32 %v91, %v1125
    %v1142 = vadd.f32 %v91, %v1126
    %v1143 = vadd.f32 %v91, %v1127
    %v1144 = vadd.f32 %v91, %v1128
    %v1145 = vadd.f32 %v91, %v1129
    %v1146 = vadd.f32 %v91, %v1130
    %v1147 = vadd.f32 %v91, %v1131
    %v1148 = vadd.f32 %v91, %v1132
    %v1149 = vadd.f32 %v91, %v1133
    %v1150 = vadd.f32 %v91, %v1134
    %v1151 = vadd.f32 %v91, %v1135
    %v1152 = vmul.f32 %v1093, %v226
    %v1153 = vmul.f32 %v1094, %v226
    %v1154 = vmul.f32 %v1096, %v226
    %v1155 = vmul.f32 %v1097, %v226
    %v1156 = vmul.f32 %v1099, %v226
    %v1157 = vmul.f32 %v1100, %v226
    %v1158 = vmul.f32 %v1102, %v226
    %v1159 = vmul.f32 %v1103, %v226
    %v1160 = vmul.f32 %v1105, %v226
    %v1161 = vmul.f32 %v1106, %v226
    %v1162 = vmul.f32 %v1108, %v226
    %v1163 = vmul.f32 %v1109, %v226
    %v1164 = vmul.f32 %v1111, %v226
    %v1165 = vmul.f32 %v1112, %v226
    %v1166 = vmul.f32 %v1114, %v226
    %v1167 = vmul.f32 %v1115, %v226
    %v1168 = vadd.f32 %v1136, %v1152
    %v1169 = vadd.f32 %v1137, %v1153
    %v1170 = vadd.f32 %v1138, %v1154
    %v1171 = vadd.f32 %v1139, %v1155
    %v1172 = vadd.f32 %v1140, %v1156
    %v1173 = vadd.f32 %v1141, %v1157
    %v1174 = vadd.f32 %v1142, %v1158
    %v1175 = vadd.f32 %v1143, %v1159
    %v1176 = vadd.f32 %v1144, %v1160
    %v1177 = vadd.f32 %v1145, %v1161
    %v1178 = vadd.f32 %v1146, %v1162
    %v1179 = vadd.f32 %v1147, %v1163
    %v1180 = vadd.f32 %v1148, %v1164
    %v1181 = vadd.f32 %v1149, %v1165
    %v1182 = vadd.f32 %v1150, %v1166
    %v1183 = vadd.f32 %v1151, %v1167
    %v1184 = vmul.f32 %v1096, %v262
    %v1185 = vmul.f32 %v1097, %v262
    %v1186 = vmul.f32 %v1099, %v262
    %v1187 = vmul.f32 %v1100, %v262
    %v1188 = vmul.f32 %v1102, %v262
    %v1189 = vmul.f32 %v1103, %v262
    %v1190 = vmul.f32 %v1105, %v262
    %v1191 = vmul.f32 %v1106, %v262
    %v1192 = vmul.f32 %v1108, %v262
    %v1193 = vmul.f32 %v1109, %v262
    %v1194 = vmul.f32 %v1111, %v262
    %v1195 = vmul.f32 %v1112, %v262
    %v1196 = vmul.f32 %v1114, %v262
    %v1197 = vmul.f32 %v1115, %v262
    %v1198 = vmul.f32 %v1117, %v262
    %v1199 = vmul.f32 %v1118, %v262
    %v1200 = vadd.f32 %v1168, %v1184
    %v1201 = vadd.f32 %v1169, %v1185
    %v1202 = vadd.f32 %v1170, %v1186
    %v1203 = vadd.f32 %v1171, %v1187
    %v1204 = vadd.f32 %v1172, %v1188
    %v1205 = vadd.f32 %v1173, %v1189
    %v1206 = vadd.f32 %v1174, %v1190
    %v1207 = vadd.f32 %v1175, %v1191
    %v1208 = vadd.f32 %v1176, %v1192
    %v1209 = vadd.f32 %v1177, %v1193
    %v1210 = vadd.f32 %v1178, %v1194
    %v1211 = vadd.f32 %v1179, %v1195
    %v1212 = vadd.f32 %v1180, %v1196
    %v1213 = vadd.f32 %v1181, %v1197
    %v1214 = vadd.f32 %v1182, %v1198
    %v1215 = vadd.f32 %v1183, %v1199
    %v1216 = vmul.f32 %v1090, %v298
    %v1217 = vmul.f32 %v1091, %v298
    %v1218 = vmul.f32 %v1092, %v298
    %v1219 = vmul.f32 %v1093, %v298
    %v1220 = vmul.f32 %v1094, %v298
    %v1221 = vmul.f32 %v1095, %v298
    %v1222 = vmul.f32 %v1096, %v298
    %v1223 = vmul.f32 %v1097, %v298
    %v1224 = vmul.f32 %v1098, %v298
    %v1225 = vmul.f32 %v1099, %v298
    %v1226 = vmul.f32 %v1100, %v298
    %v1227 = vmul.f32 %v1101, %v298
    %v1228 = vmul.f32 %v1102, %v298
    %v1229 = vmul.f32 %v1103, %v298
    %v1230 = vmul.f32 %v1104, %v298
    %v1231 = vmul.f32 %v1105, %v298
    %v1232 = vmul.f32 %v1106, %v298
    %v1233 = vmul.f32 %v1107, %v298
    %v1234 = vmul.f32 %v1108, %v298
    %v1235 = vmul.f32 %v1109, %v298
    %v1236 = vmul.f32 %v1110, %v298
    %v1237 = vmul.f32 %v1111, %v298
    %v1238 = vmul.f32 %v1112, %v298
    %v1239 = vmul.f32 %v1113, %v298
    %v1264 = vrot.slane %v1216, 1
    %v1265 = vrot.slane %v1217, 1
    %v1266 = vsel %vm347, %v1264, %v1265
    %v1267 = vrot.slane %v1218, 1
    %v1268 = vsel %vm347, %v1265, %v1267
    %v1269 = vrot.slane %v1219, 1
    %v1270 = vrot.slane %v1220, 1
    %v1271 = vsel %vm347, %v1269, %v1270
    %v1272 = vrot.slane %v1221, 1
    %v1273 = vsel %vm347, %v1270, %v1272
    %v1274 = vrot.slane %v1222, 1
    %v1275 = vrot.slane %v1223, 1
    %v1276 = vsel %vm347, %v1274, %v1275
    %v1277 = vrot.slane %v1224, 1
    %v1278 = vsel %vm347, %v1275, %v1277
    %v1279 = vrot.slane %v1225, 1
    %v1280 = vrot.slane %v1226, 1
    %v1281 = vsel %vm347, %v1279, %v1280
    %v1282 = vrot.slane %v1227, 1
    %v1283 = vsel %vm347, %v1280, %v1282
    %v1284 = vrot.slane %v1228, 1
    %v1285 = vrot.slane %v1229, 1
    %v1286 = vsel %vm347, %v1284, %v1285
    %v1287 = vrot.slane %v1230, 1
    %v1288 = vsel %vm347, %v1285, %v1287
    %v1289 = vrot.slane %v1231, 1
    %v1290 = vrot.slane %v1232, 1
    %v1291 = vsel %vm347, %v1289, %v1290
    %v1292 = vrot.slane %v1233, 1
    %v1293 = vsel %vm347, %v1290, %v1292
    %v1294 = vrot.slane %v1234, 1
    %v1295 = vrot.slane %v1235, 1
    %v1296 = vsel %vm347, %v1294, %v1295
    %v1297 = vrot.slane %v1236, 1
    %v1298 = vsel %vm347, %v1295, %v1297
    %v1299 = vrot.slane %v1237, 1
    %v1300 = vrot.slane %v1238, 1
    %v1301 = vsel %vm347, %v1299, %v1300
    %v1302 = vrot.slane %v1239, 1
    %v1303 = vsel %vm347, %v1300, %v1302
    %v1320 = vadd.f32 %v1200, %v1266
    %v1321 = vadd.f32 %v1201, %v1268
    %v1322 = vadd.f32 %v1202, %v1271
    %v1323 = vadd.f32 %v1203, %v1273
    %v1324 = vadd.f32 %v1204, %v1276
    %v1325 = vadd.f32 %v1205, %v1278
    %v1326 = vadd.f32 %v1206, %v1281
    %v1327 = vadd.f32 %v1207, %v1283
    %v1328 = vadd.f32 %v1208, %v1286
    %v1329 = vadd.f32 %v1209, %v1288
    %v1330 = vadd.f32 %v1210, %v1291
    %v1331 = vadd.f32 %v1211, %v1293
    %v1332 = vadd.f32 %v1212, %v1296
    %v1333 = vadd.f32 %v1213, %v1298
    %v1334 = vadd.f32 %v1214, %v1301
    %v1335 = vadd.f32 %v1215, %v1303
    %v1336 = vmul.f32 %v1093, %v423
    %v1337 = vmul.f32 %v1094, %v423
    %v1338 = vmul.f32 %v1095, %v423
    %v1339 = vmul.f32 %v1096, %v423
    %v1340 = vmul.f32 %v1097, %v423
    %v1341 = vmul.f32 %v1098, %v423
    %v1342 = vmul.f32 %v1099, %v423
    %v1343 = vmul.f32 %v1100, %v423
    %v1344 = vmul.f32 %v1101, %v423
    %v1345 = vmul.f32 %v1102, %v423
    %v1346 = vmul.f32 %v1103, %v423
    %v1347 = vmul.f32 %v1104, %v423
    %v1348 = vmul.f32 %v1105, %v423
    %v1349 = vmul.f32 %v1106, %v423
    %v1350 = vmul.f32 %v1107, %v423
    %v1351 = vmul.f32 %v1108, %v423
    %v1352 = vmul.f32 %v1109, %v423
    %v1353 = vmul.f32 %v1110, %v423
    %v1354 = vmul.f32 %v1111, %v423
    %v1355 = vmul.f32 %v1112, %v423
    %v1356 = vmul.f32 %v1113, %v423
    %v1357 = vmul.f32 %v1114, %v423
    %v1358 = vmul.f32 %v1115, %v423
    %v1359 = vmul.f32 %v1116, %v423
    %v1384 = vrot.slane %v1336, 1
    %v1385 = vrot.slane %v1337, 1
    %v1386 = vsel %vm347, %v1384, %v1385
    %v1387 = vrot.slane %v1338, 1
    %v1388 = vsel %vm347, %v1385, %v1387
    %v1389 = vrot.slane %v1339, 1
    %v1390 = vrot.slane %v1340, 1
    %v1391 = vsel %vm347, %v1389, %v1390
    %v1392 = vrot.slane %v1341, 1
    %v1393 = vsel %vm347, %v1390, %v1392
    %v1394 = vrot.slane %v1342, 1
    %v1395 = vrot.slane %v1343, 1
    %v1396 = vsel %vm347, %v1394, %v1395
    %v1397 = vrot.slane %v1344, 1
    %v1398 = vsel %vm347, %v1395, %v1397
    %v1399 = vrot.slane %v1345, 1
    %v1400 = vrot.slane %v1346, 1
    %v1401 = vsel %vm347, %v1399, %v1400
    %v1402 = vrot.slane %v1347, 1
    %v1403 = vsel %vm347, %v1400, %v1402
    %v1404 = vrot.slane %v1348, 1
    %v1405 = vrot.slane %v1349, 1
    %v1406 = vsel %vm347, %v1404, %v1405
    %v1407 = vrot.slane %v1350, 1
    %v1408 = vsel %vm347, %v1405, %v1407
    %v1409 = vrot.slane %v1351, 1
    %v1410 = vrot.slane %v1352, 1
    %v1411 = vsel %vm347, %v1409, %v1410
    %v1412 = vrot.slane %v1353, 1
    %v1413 = vsel %vm347, %v1410, %v1412
    %v1414 = vrot.slane %v1354, 1
    %v1415 = vrot.slane %v1355, 1
    %v1416 = vsel %vm347, %v1414, %v1415
    %v1417 = vrot.slane %v1356, 1
    %v1418 = vsel %vm347, %v1415, %v1417
    %v1419 = vrot.slane %v1357, 1
    %v1420 = vrot.slane %v1358, 1
    %v1421 = vsel %vm347, %v1419, %v1420
    %v1422 = vrot.slane %v1359, 1
    %v1423 = vsel %vm347, %v1420, %v1422
    %v1440 = vadd.f32 %v1320, %v1386
    %v1441 = vadd.f32 %v1321, %v1388
    %v1442 = vadd.f32 %v1322, %v1391
    %v1443 = vadd.f32 %v1323, %v1393
    %v1444 = vadd.f32 %v1324, %v1396
    %v1445 = vadd.f32 %v1325, %v1398
    %v1446 = vadd.f32 %v1326, %v1401
    %v1447 = vadd.f32 %v1327, %v1403
    %v1448 = vadd.f32 %v1328, %v1406
    %v1449 = vadd.f32 %v1329, %v1408
    %v1450 = vadd.f32 %v1330, %v1411
    %v1451 = vadd.f32 %v1331, %v1413
    %v1452 = vadd.f32 %v1332, %v1416
    %v1453 = vadd.f32 %v1333, %v1418
    %v1454 = vadd.f32 %v1334, %v1421
    %v1455 = vadd.f32 %v1335, %v1423
    %v1456 = vmul.f32 %v1096, %v547
    %v1457 = vmul.f32 %v1097, %v547
    %v1458 = vmul.f32 %v1098, %v547
    %v1459 = vmul.f32 %v1099, %v547
    %v1460 = vmul.f32 %v1100, %v547
    %v1461 = vmul.f32 %v1101, %v547
    %v1462 = vmul.f32 %v1102, %v547
    %v1463 = vmul.f32 %v1103, %v547
    %v1464 = vmul.f32 %v1104, %v547
    %v1465 = vmul.f32 %v1105, %v547
    %v1466 = vmul.f32 %v1106, %v547
    %v1467 = vmul.f32 %v1107, %v547
    %v1468 = vmul.f32 %v1108, %v547
    %v1469 = vmul.f32 %v1109, %v547
    %v1470 = vmul.f32 %v1110, %v547
    %v1471 = vmul.f32 %v1111, %v547
    %v1472 = vmul.f32 %v1112, %v547
    %v1473 = vmul.f32 %v1113, %v547
    %v1474 = vmul.f32 %v1114, %v547
    %v1475 = vmul.f32 %v1115, %v547
    %v1476 = vmul.f32 %v1116, %v547
    %v1477 = vmul.f32 %v1117, %v547
    %v1478 = vmul.f32 %v1118, %v547
    %v1479 = vmul.f32 %v1119, %v547
    %v1504 = vrot.slane %v1456, 1
    %v1505 = vrot.slane %v1457, 1
    %v1506 = vsel %vm347, %v1504, %v1505
    %v1507 = vrot.slane %v1458, 1
    %v1508 = vsel %vm347, %v1505, %v1507
    %v1509 = vrot.slane %v1459, 1
    %v1510 = vrot.slane %v1460, 1
    %v1511 = vsel %vm347, %v1509, %v1510
    %v1512 = vrot.slane %v1461, 1
    %v1513 = vsel %vm347, %v1510, %v1512
    %v1514 = vrot.slane %v1462, 1
    %v1515 = vrot.slane %v1463, 1
    %v1516 = vsel %vm347, %v1514, %v1515
    %v1517 = vrot.slane %v1464, 1
    %v1518 = vsel %vm347, %v1515, %v1517
    %v1519 = vrot.slane %v1465, 1
    %v1520 = vrot.slane %v1466, 1
    %v1521 = vsel %vm347, %v1519, %v1520
    %v1522 = vrot.slane %v1467, 1
    %v1523 = vsel %vm347, %v1520, %v1522
    %v1524 = vrot.slane %v1468, 1
    %v1525 = vrot.slane %v1469, 1
    %v1526 = vsel %vm347, %v1524, %v1525
    %v1527 = vrot.slane %v1470, 1
    %v1528 = vsel %vm347, %v1525, %v1527
    %v1529 = vrot.slane %v1471, 1
    %v1530 = vrot.slane %v1472, 1
    %v1531 = vsel %vm347, %v1529, %v1530
    %v1532 = vrot.slane %v1473, 1
    %v1533 = vsel %vm347, %v1530, %v1532
    %v1534 = vrot.slane %v1474, 1
    %v1535 = vrot.slane %v1475, 1
    %v1536 = vsel %vm347, %v1534, %v1535
    %v1537 = vrot.slane %v1476, 1
    %v1538 = vsel %vm347, %v1535, %v1537
    %v1539 = vrot.slane %v1477, 1
    %v1540 = vrot.slane %v1478, 1
    %v1541 = vsel %vm347, %v1539, %v1540
    %v1542 = vrot.slane %v1479, 1
    %v1543 = vsel %vm347, %v1540, %v1542
    %v1560 = vadd.f32 %v1440, %v1506
    %v1561 = vadd.f32 %v1441, %v1508
    %v1562 = vadd.f32 %v1442, %v1511
    %v1563 = vadd.f32 %v1443, %v1513
    %v1564 = vadd.f32 %v1444, %v1516
    %v1565 = vadd.f32 %v1445, %v1518
    %v1566 = vadd.f32 %v1446, %v1521
    %v1567 = vadd.f32 %v1447, %v1523
    %v1568 = vadd.f32 %v1448, %v1526
    %v1569 = vadd.f32 %v1449, %v1528
    %v1570 = vadd.f32 %v1450, %v1531
    %v1571 = vadd.f32 %v1451, %v1533
    %v1572 = vadd.f32 %v1452, %v1536
    %v1573 = vadd.f32 %v1453, %v1538
    %v1574 = vadd.f32 %v1454, %v1541
    %v1575 = vadd.f32 %v1455, %v1543
    %v1576 = vmul.f32 %v1090, %v671
    %v1577 = vmul.f32 %v1091, %v671
    %v1578 = vmul.f32 %v1092, %v671
    %v1579 = vmul.f32 %v1093, %v671
    %v1580 = vmul.f32 %v1094, %v671
    %v1581 = vmul.f32 %v1095, %v671
    %v1582 = vmul.f32 %v1096, %v671
    %v1583 = vmul.f32 %v1097, %v671
    %v1584 = vmul.f32 %v1098, %v671
    %v1585 = vmul.f32 %v1099, %v671
    %v1586 = vmul.f32 %v1100, %v671
    %v1587 = vmul.f32 %v1101, %v671
    %v1588 = vmul.f32 %v1102, %v671
    %v1589 = vmul.f32 %v1103, %v671
    %v1590 = vmul.f32 %v1104, %v671
    %v1591 = vmul.f32 %v1105, %v671
    %v1592 = vmul.f32 %v1106, %v671
    %v1593 = vmul.f32 %v1107, %v671
    %v1594 = vmul.f32 %v1108, %v671
    %v1595 = vmul.f32 %v1109, %v671
    %v1596 = vmul.f32 %v1110, %v671
    %v1597 = vmul.f32 %v1111, %v671
    %v1598 = vmul.f32 %v1112, %v671
    %v1599 = vmul.f32 %v1113, %v671
    %v1624 = vrot.slane %v1576, 2
    %v1625 = vrot.slane %v1577, 2
    %v1626 = vsel %vm720, %v1624, %v1625
    %v1627 = vrot.slane %v1578, 2
    %v1628 = vsel %vm720, %v1625, %v1627
    %v1629 = vrot.slane %v1579, 2
    %v1630 = vrot.slane %v1580, 2
    %v1631 = vsel %vm720, %v1629, %v1630
    %v1632 = vrot.slane %v1581, 2
    %v1633 = vsel %vm720, %v1630, %v1632
    %v1634 = vrot.slane %v1582, 2
    %v1635 = vrot.slane %v1583, 2
    %v1636 = vsel %vm720, %v1634, %v1635
    %v1637 = vrot.slane %v1584, 2
    %v1638 = vsel %vm720, %v1635, %v1637
    %v1639 = vrot.slane %v1585, 2
    %v1640 = vrot.slane %v1586, 2
    %v1641 = vsel %vm720, %v1639, %v1640
    %v1642 = vrot.slane %v1587, 2
    %v1643 = vsel %vm720, %v1640, %v1642
    %v1644 = vrot.slane %v1588, 2
    %v1645 = vrot.slane %v1589, 2
    %v1646 = vsel %vm720, %v1644, %v1645
    %v1647 = vrot.slane %v1590, 2
    %v1648 = vsel %vm720, %v1645, %v1647
    %v1649 = vrot.slane %v1591, 2
    %v1650 = vrot.slane %v1592, 2
    %v1651 = vsel %vm720, %v1649, %v1650
    %v1652 = vrot.slane %v1593, 2
    %v1653 = vsel %vm720, %v1650, %v1652
    %v1654 = vrot.slane %v1594, 2
    %v1655 = vrot.slane %v1595, 2
    %v1656 = vsel %vm720, %v1654, %v1655
    %v1657 = vrot.slane %v1596, 2
    %v1658 = vsel %vm720, %v1655, %v1657
    %v1659 = vrot.slane %v1597, 2
    %v1660 = vrot.slane %v1598, 2
    %v1661 = vsel %vm720, %v1659, %v1660
    %v1662 = vrot.slane %v1599, 2
    %v1663 = vsel %vm720, %v1660, %v1662
    %v1680 = vadd.f32 %v1560, %v1626
    %v1681 = vadd.f32 %v1561, %v1628
    %v1682 = vadd.f32 %v1562, %v1631
    %v1683 = vadd.f32 %v1563, %v1633
    %v1684 = vadd.f32 %v1564, %v1636
    %v1685 = vadd.f32 %v1565, %v1638
    %v1686 = vadd.f32 %v1566, %v1641
    %v1687 = vadd.f32 %v1567, %v1643
    %v1688 = vadd.f32 %v1568, %v1646
    %v1689 = vadd.f32 %v1569, %v1648
    %v1690 = vadd.f32 %v1570, %v1651
    %v1691 = vadd.f32 %v1571, %v1653
    %v1692 = vadd.f32 %v1572, %v1656
    %v1693 = vadd.f32 %v1573, %v1658
    %v1694 = vadd.f32 %v1574, %v1661
    %v1695 = vadd.f32 %v1575, %v1663
    %v1696 = vmul.f32 %v1093, %v796
    %v1697 = vmul.f32 %v1094, %v796
    %v1698 = vmul.f32 %v1095, %v796
    %v1699 = vmul.f32 %v1096, %v796
    %v1700 = vmul.f32 %v1097, %v796
    %v1701 = vmul.f32 %v1098, %v796
    %v1702 = vmul.f32 %v1099, %v796
    %v1703 = vmul.f32 %v1100, %v796
    %v1704 = vmul.f32 %v1101, %v796
    %v1705 = vmul.f32 %v1102, %v796
    %v1706 = vmul.f32 %v1103, %v796
    %v1707 = vmul.f32 %v1104, %v796
    %v1708 = vmul.f32 %v1105, %v796
    %v1709 = vmul.f32 %v1106, %v796
    %v1710 = vmul.f32 %v1107, %v796
    %v1711 = vmul.f32 %v1108, %v796
    %v1712 = vmul.f32 %v1109, %v796
    %v1713 = vmul.f32 %v1110, %v796
    %v1714 = vmul.f32 %v1111, %v796
    %v1715 = vmul.f32 %v1112, %v796
    %v1716 = vmul.f32 %v1113, %v796
    %v1717 = vmul.f32 %v1114, %v796
    %v1718 = vmul.f32 %v1115, %v796
    %v1719 = vmul.f32 %v1116, %v796
    %v1744 = vrot.slane %v1696, 2
    %v1745 = vrot.slane %v1697, 2
    %v1746 = vsel %vm720, %v1744, %v1745
    %v1747 = vrot.slane %v1698, 2
    %v1748 = vsel %vm720, %v1745, %v1747
    %v1749 = vrot.slane %v1699, 2
    %v1750 = vrot.slane %v1700, 2
    %v1751 = vsel %vm720, %v1749, %v1750
    %v1752 = vrot.slane %v1701, 2
    %v1753 = vsel %vm720, %v1750, %v1752
    %v1754 = vrot.slane %v1702, 2
    %v1755 = vrot.slane %v1703, 2
    %v1756 = vsel %vm720, %v1754, %v1755
    %v1757 = vrot.slane %v1704, 2
    %v1758 = vsel %vm720, %v1755, %v1757
    %v1759 = vrot.slane %v1705, 2
    %v1760 = vrot.slane %v1706, 2
    %v1761 = vsel %vm720, %v1759, %v1760
    %v1762 = vrot.slane %v1707, 2
    %v1763 = vsel %vm720, %v1760, %v1762
    %v1764 = vrot.slane %v1708, 2
    %v1765 = vrot.slane %v1709, 2
    %v1766 = vsel %vm720, %v1764, %v1765
    %v1767 = vrot.slane %v1710, 2
    %v1768 = vsel %vm720, %v1765, %v1767
    %v1769 = vrot.slane %v1711, 2
    %v1770 = vrot.slane %v1712, 2
    %v1771 = vsel %vm720, %v1769, %v1770
    %v1772 = vrot.slane %v1713, 2
    %v1773 = vsel %vm720, %v1770, %v1772
    %v1774 = vrot.slane %v1714, 2
    %v1775 = vrot.slane %v1715, 2
    %v1776 = vsel %vm720, %v1774, %v1775
    %v1777 = vrot.slane %v1716, 2
    %v1778 = vsel %vm720, %v1775, %v1777
    %v1779 = vrot.slane %v1717, 2
    %v1780 = vrot.slane %v1718, 2
    %v1781 = vsel %vm720, %v1779, %v1780
    %v1782 = vrot.slane %v1719, 2
    %v1783 = vsel %vm720, %v1780, %v1782
    %v1800 = vadd.f32 %v1680, %v1746
    %v1801 = vadd.f32 %v1681, %v1748
    %v1802 = vadd.f32 %v1682, %v1751
    %v1803 = vadd.f32 %v1683, %v1753
    %v1804 = vadd.f32 %v1684, %v1756
    %v1805 = vadd.f32 %v1685, %v1758
    %v1806 = vadd.f32 %v1686, %v1761
    %v1807 = vadd.f32 %v1687, %v1763
    %v1808 = vadd.f32 %v1688, %v1766
    %v1809 = vadd.f32 %v1689, %v1768
    %v1810 = vadd.f32 %v1690, %v1771
    %v1811 = vadd.f32 %v1691, %v1773
    %v1812 = vadd.f32 %v1692, %v1776
    %v1813 = vadd.f32 %v1693, %v1778
    %v1814 = vadd.f32 %v1694, %v1781
    %v1815 = vadd.f32 %v1695, %v1783
    %v1816 = vmul.f32 %v1096, %v920
    %v1817 = vmul.f32 %v1097, %v920
    %v1818 = vmul.f32 %v1098, %v920
    %v1819 = vmul.f32 %v1099, %v920
    %v1820 = vmul.f32 %v1100, %v920
    %v1821 = vmul.f32 %v1101, %v920
    %v1822 = vmul.f32 %v1102, %v920
    %v1823 = vmul.f32 %v1103, %v920
    %v1824 = vmul.f32 %v1104, %v920
    %v1825 = vmul.f32 %v1105, %v920
    %v1826 = vmul.f32 %v1106, %v920
    %v1827 = vmul.f32 %v1107, %v920
    %v1828 = vmul.f32 %v1108, %v920
    %v1829 = vmul.f32 %v1109, %v920
    %v1830 = vmul.f32 %v1110, %v920
    %v1831 = vmul.f32 %v1111, %v920
    %v1832 = vmul.f32 %v1112, %v920
    %v1833 = vmul.f32 %v1113, %v920
    %v1834 = vmul.f32 %v1114, %v920
    %v1835 = vmul.f32 %v1115, %v920
    %v1836 = vmul.f32 %v1116, %v920
    %v1837 = vmul.f32 %v1117, %v920
    %v1838 = vmul.f32 %v1118, %v920
    %v1839 = vmul.f32 %v1119, %v920
    %v1864 = vrot.slane %v1816, 2
    %v1865 = vrot.slane %v1817, 2
    %v1866 = vsel %vm720, %v1864, %v1865
    %v1867 = vrot.slane %v1818, 2
    %v1868 = vsel %vm720, %v1865, %v1867
    %v1869 = vrot.slane %v1819, 2
    %v1870 = vrot.slane %v1820, 2
    %v1871 = vsel %vm720, %v1869, %v1870
    %v1872 = vrot.slane %v1821, 2
    %v1873 = vsel %vm720, %v1870, %v1872
    %v1874 = vrot.slane %v1822, 2
    %v1875 = vrot.slane %v1823, 2
    %v1876 = vsel %vm720, %v1874, %v1875
    %v1877 = vrot.slane %v1824, 2
    %v1878 = vsel %vm720, %v1875, %v1877
    %v1879 = vrot.slane %v1825, 2
    %v1880 = vrot.slane %v1826, 2
    %v1881 = vsel %vm720, %v1879, %v1880
    %v1882 = vrot.slane %v1827, 2
    %v1883 = vsel %vm720, %v1880, %v1882
    %v1884 = vrot.slane %v1828, 2
    %v1885 = vrot.slane %v1829, 2
    %v1886 = vsel %vm720, %v1884, %v1885
    %v1887 = vrot.slane %v1830, 2
    %v1888 = vsel %vm720, %v1885, %v1887
    %v1889 = vrot.slane %v1831, 2
    %v1890 = vrot.slane %v1832, 2
    %v1891 = vsel %vm720, %v1889, %v1890
    %v1892 = vrot.slane %v1833, 2
    %v1893 = vsel %vm720, %v1890, %v1892
    %v1894 = vrot.slane %v1834, 2
    %v1895 = vrot.slane %v1835, 2
    %v1896 = vsel %vm720, %v1894, %v1895
    %v1897 = vrot.slane %v1836, 2
    %v1898 = vsel %vm720, %v1895, %v1897
    %v1899 = vrot.slane %v1837, 2
    %v1900 = vrot.slane %v1838, 2
    %v1901 = vsel %vm720, %v1899, %v1900
    %v1902 = vrot.slane %v1839, 2
    %v1903 = vsel %vm720, %v1900, %v1902
    %v1920 = vadd.f32 %v1800, %v1866
    %v1921 = vadd.f32 %v1801, %v1868
    %v1922 = vadd.f32 %v1802, %v1871
    %v1923 = vadd.f32 %v1803, %v1873
    %v1924 = vadd.f32 %v1804, %v1876
    %v1925 = vadd.f32 %v1805, %v1878
    %v1926 = vadd.f32 %v1806, %v1881
    %v1927 = vadd.f32 %v1807, %v1883
    %v1928 = vadd.f32 %v1808, %v1886
    %v1929 = vadd.f32 %v1809, %v1888
    %v1930 = vadd.f32 %v1810, %v1891
    %v1931 = vadd.f32 %v1811, %v1893
    %v1932 = vadd.f32 %v1812, %v1896
    %v1933 = vadd.f32 %v1813, %v1898
    %v1934 = vadd.f32 %v1814, %v1901
    %v1935 = vadd.f32 %v1815, %v1903
    %v1936 = vmax.f32 %v1920, 0.0
    %v1937 = vmax.f32 %v1921, 0.0
    %v1938 = vmax.f32 %v1922, 0.0
    %v1939 = vmax.f32 %v1923, 0.0
    %v1940 = vmax.f32 %v1924, 0.0
    %v1941 = vmax.f32 %v1925, 0.0
    %v1942 = vmax.f32 %v1926, 0.0
    %v1943 = vmax.f32 %v1927, 0.0
    %v1944 = vmax.f32 %v1928, 0.0
    %v1945 = vmax.f32 %v1929, 0.0
    %v1946 = vmax.f32 %v1930, 0.0
    %v1947 = vmax.f32 %v1931, 0.0
    %v1948 = vmax.f32 %v1932, 0.0
    %v1949 = vmax.f32 %v1933, 0.0
    %v1950 = vmax.f32 %v1934, 0.0
    %v1951 = vmax.f32 %v1935, 0.0
    %v1952 = vmin.f32 %v1936, 6.0
    %v1953 = vmin.f32 %v1937, 6.0
    %v1954 = vmin.f32 %v1938, 6.0
    %v1955 = vmin.f32 %v1939, 6.0
    %v1956 = vmin.f32 %v1940, 6.0
    %v1957 = vmin.f32 %v1941, 6.0
    %v1958 = vmin.f32 %v1942, 6.0
    %v1959 = vmin.f32 %v1943, 6.0
    %v1960 = vmin.f32 %v1944, 6.0
    %v1961 = vmin.f32 %v1945, 6.0
    %v1962 = vmin.f32 %v1946, 6.0
    %v1963 = vmin.f32 %v1947, 6.0
    %v1964 = vmin.f32 %v1948, 6.0
    %v1965 = vmin.f32 %v1949, 6.0
    %v1966 = vmin.f32 %v1950, 6.0
    %v1967 = vmin.f32 %v1951, 6.0
    %s1968 = scalar_lea.vmem [#allocation8], 128
    %1969 = vst [vmem:[%s1968] sm:$0xff] %v1952
    %1970 = vst [vmem:[%s1968 + $0x8] sm:$0xff] %v1953
    %1971 = vst [vmem:[%s1968 + $0x10] sm:$0xff] %v1954
    %1972 = vst [vmem:[%s1968 + $0x18] sm:$0xff] %v1955
    %1973 = vst [vmem:[%s1968 + $0x20] sm:$0xff] %v1956
    %1974 = vst [vmem:[%s1968 + $0x28] sm:$0xff] %v1957
    %1975 = vst [vmem:[%s1968 + $0x30] sm:$0xff] %v1958
    %1976 = vst [vmem:[%s1968 + $0x38] sm:$0xff] %v1959
    %1977 = vst [vmem:[%s1968 + $0x40] sm:$0xff] %v1960
    %1978 = vst [vmem:[%s1968 + $0x48] sm:$0xff] %v1961
    %1979 = vst [vmem:[%s1968 + $0x50] sm:$0xff] %v1962
    %1980 = vst [vmem:[%s1968 + $0x58] sm:$0xff] %v1963
    %1981 = vst [vmem:[%s1968 + $0x60] sm:$0xff] %v1964
    %1982 = vst [vmem:[%s1968 + $0x68] sm:$0xff] %v1965
    %1983 = vst [vmem:[%s1968 + $0x70] sm:$0xff] %v1966
    %1984 = vst [vmem:[%s1968 + $0x78] sm:$0xff] %v1967
    // Predicated region
    $region22: #{tpu_custom_call.1} parent=1 // pred_check
      _
    $region23: #{tpu_custom_call.1} parent=1 // pred_check_branch
      %1986 = sbr.rel (0) target = $region25
    $region24: #{tpu_custom_call.1} parent=1 // pred_region
      %s1988 = ssub.s32 4096, 4096
      %1989 = vsyncadd [#allocation5], %s1988
      %s1990 = sshll.u32 [#allocation8], 4
      %s1991 = int_to_ptr.vmem [resolvable:$true] %s1990
      %1996 = dma.vmem_to_hbm [thread:$0]  %s1991, 4096, %s3, [#allocation5], 128, 128, 8
    $region25: #{tpu_custom_call.1} parent=1 // pred_fallthru
      _
    // Predicated region
    $region26: #{tpu_custom_call.1} parent=1 // pred_check
      _
    $region27: #{tpu_custom_call.1} parent=1 // pred_check_branch
      %1998 = sbr.rel (0) target = $region29
    $region28: #{tpu_custom_call.1} parent=1 // pred_region
      %1999 = dma.done [#allocation5], 4096
    $region29: #{tpu_custom_call.1} parent=1 // pred_fallthru
      _
    %2000 = vsyncpa [#allocation4], 1
    %2001 = vsyncpa [#allocation7], 1
    %2002 = vsyncpa [#allocation5], 1

</llo_original>
